<compile_context>
chip_gen: v7x
topology: tpu7x:2x2x1
jax: 0.10.0
libtpu: 0.0.40
codegen_flags: <defaults>
</compile_context>

<pallas_src>
import functools
import math

import jax
import jax.numpy as jnp
from jax.experimental import pallas as pl
from jax.experimental.pallas import tpu as pltpu


# ----------------------------------------------------------------------------
# Init-time weight preparation: linearize each (tiny) conv / transposed conv into
# a dense matrix over NCHW-flattened activations, with eval-mode BN folded in.
# ----------------------------------------------------------------------------
def _conv_to_matrix(w_oihw, h, w, stride=2, pad=1):
    """Conv2d(k=4,s=2,p=1,bias=False) as (Cin*H*W, Cout*Ho*Wo) matrix (NCHW flatten)."""
    cout, cin, _, _ = w_oihw.shape
    k = cin * h * w
    basis = jnp.eye(k, dtype=jnp.float32).reshape(k, cin, h, w)
    y = jax.lax.conv_general_dilated(
        basis, w_oihw.astype(jnp.float32),
        window_strides=(stride, stride),
        padding=((pad, pad), (pad, pad)),
        dimension_numbers=("NCHW", "OIHW", "NCHW"))
    ho, wo = y.shape[2], y.shape[3]
    return y.reshape(k, cout * ho * wo), (ho, wo)


def _tconv_to_matrix(w_iohw, h, w, stride=2, pad=1):
    """ConvTranspose2d(k=4,s=2,p=1,bias=False) as (Cin*H*W, Cout*Oh*Ow) matrix.

    PyTorch ConvTranspose2d == lhs-dilated cross-correlation with the spatially
    flipped, channel-swapped kernel and padding (k-1-p).
    """
    cin, cout, kh, kw = w_iohw.shape
    k = cin * h * w
    basis = jnp.eye(k, dtype=jnp.float32).reshape(k, cin, h, w)
    w_conv = jnp.flip(w_iohw.astype(jnp.float32), axis=(2, 3)).transpose(1, 0, 2, 3)
    y = jax.lax.conv_general_dilated(
        basis, w_conv, window_strides=(1, 1),
        padding=((kh - 1 - pad, kh - 1 - pad), (kw - 1 - pad, kw - 1 - pad)),
        lhs_dilation=(stride, stride),
        dimension_numbers=("NCHW", "OIHW", "NCHW"))
    ho, wo = y.shape[2], y.shape[3]
    return y.reshape(k, cout * ho * wo), (ho, wo)


def _bn_fold(mat_f32, gamma, beta, rm, rv, spatial, eps=1e-5):
    """Fold eval-mode BN (per output channel) into the layer matrix + bias row."""
    scale = gamma / jnp.sqrt(rv + eps)
    shift = beta - rm * scale
    scale_col = jnp.repeat(scale, spatial)            # column order is (c, h, w)
    shift_col = jnp.repeat(shift, spatial)
    return mat_f32 * scale_col[None, :], shift_col.reshape(1, -1).astype(jnp.float32)


def init_vae_params(key, input_size=16, nc=1, nh=8, nz=16):
    L = int(round(math.log(input_size) / math.log(2)))
    F = nh * 2 ** (L - 1)
    keys = iter(jax.random.split(key, 64))

    def w(shape, s=0.05):
        return (s * jax.random.normal(next(keys), shape)).astype(jnp.float32)

    def bn_stats(c):
        gamma = 1.0 + 0.1 * jax.random.normal(next(keys), (c,))
        beta = 0.1 * jax.random.normal(next(keys), (c,))
        rm = 0.1 * jax.random.normal(next(keys), (c,))
        rv = 1.0 + 0.1 * jnp.abs(jax.random.normal(next(keys), (c,)))
        return gamma, beta, rm, rv

    # encoder: L x [Conv2d(4,2,1,bias=False) + BN(eval) + LeakyReLU(True -> identity)]
    enc = []
    h = w_ = input_size
    for i in range(L):
        cin = nc if i == 0 else nh * 2 ** (i - 1)
        cout = nh * 2 ** i
        wc = w((cout, cin, 4, 4))
        mat, (ho, wo) = _conv_to_matrix(wc, h, w_)
        gamma, beta, rm, rv = bn_stats(cout)
        mat, bias = _bn_fold(mat, gamma, beta, rm, rv, ho * wo)
        enc.append((mat.astype(jnp.bfloat16), bias))
        h, w_ = ho, wo

    # encoder final Linear(F, F) (no activation) -- folded into the heads below
    we, be = w((F, F)), w((F,))
    # mu / log_var heads: Linear(F, nz) + LeakyReLU(0.01) + Dropout(eval) -- fused along N
    wm, bm = w((nz, F)), w((nz,))
    wl, bl = w((nz, F)), w((nz,))
    wh = jnp.concatenate([wm.T, wl.T], axis=1)                      # (F, 2*nz)
    bh = jnp.concatenate([bm, bl]).reshape(1, 2 * nz)
    wh_fused = (we.T @ wh).astype(jnp.bfloat16)                     # fold enc Linear
    bh_fused = (be.reshape(1, F) @ wh + bh).astype(jnp.float32)

    # decoder Linear(nz, F) + LeakyReLU(0.01) + Dropout(eval) + Unflatten
    wd, bd = w((F, nz)), w((F,))
    dec_lin = (wd.T.astype(jnp.bfloat16), bd.reshape(1, F).astype(jnp.float32))

    # decoder: (L-1) x [ConvTranspose2d(4,2,1,bias=False) + BN(eval) + LeakyReLU(True)]
    dec = []
    h = w_ = 1
    for i in range(L - 1):
        cin = nh * 2 ** (L - i - 1)
        cout = nh * 2 ** (L - i - 2)
        wt = w((cin, cout, 4, 4))
        mat, (ho, wo) = _tconv_to_matrix(wt, h, w_)
        gamma, beta, rm, rv = bn_stats(cout)
        mat, bias = _bn_fold(mat, gamma, beta, rm, rv, ho * wo)
        dec.append((mat.astype(jnp.bfloat16), bias))
        h, w_ = ho, wo

    # final ConvTranspose2d(nh, nc, 4, 2, 1, bias=False): no BN / activation
    mat_f, _ = _tconv_to_matrix(w((nh, nc, 4, 4)), h, w_)
    dec_final = mat_f.astype(jnp.bfloat16)

    return dict(enc=enc, heads=(wh_fused, bh_fused), dec_lin=dec_lin,
                dec=dec, dec_final=dec_final)


# ----------------------------------------------------------------------------
# Single fused Pallas kernel: the whole VAE forward on VMEM-resident weights.
# ----------------------------------------------------------------------------
def _vae_kernel(*refs, n_enc, n_dec, nz):
    it = iter(refs)
    x_ref, eps_ref = next(it), next(it)
    enc = [(next(it), next(it)) for _ in range(n_enc)]
    wh, bh = next(it), next(it)
    wd, bd = next(it), next(it)
    dec = [(next(it), next(it)) for _ in range(n_dec)]
    wf = next(it)
    mu_ref, logv_ref, out_ref = next(it), next(it), next(it)

    # ---- encoder convs (Conv + BN folded into one matrix per layer; identity act) ----
    h = x_ref[...].astype(jnp.bfloat16)
    for w_ref, b_ref in enc:
        y = jnp.dot(h, w_ref[...], preferred_element_type=jnp.float32) + b_ref[...]
        h = y.astype(jnp.bfloat16)

    # ---- fused (enc Linear ->) mu / log_var heads: Linear + LeakyReLU(0.01) ----
    y = jnp.dot(h, wh[...], preferred_element_type=jnp.float32) + bh[...]
    y = jnp.where(y >= 0, y, 0.01 * y)
    mu = y[:, :nz]
    log_var = y[:, nz:]
    mu_ref[...] = mu
    logv_ref[...] = log_var

    # ---- reparameterize (eps shared across the batch, as in the reference) ----
    z = mu + eps_ref[...] * jnp.exp(0.5 * log_var)

    # ---- decoder Linear + LeakyReLU(0.01) ----
    d = jnp.dot(z.astype(jnp.bfloat16), wd[...], preferred_element_type=jnp.float32) + bd[...]
    d = jnp.where(d >= 0, d, 0.01 * d).astype(jnp.bfloat16)

    # ---- decoder transposed convs (BN folded; identity activation) ----
    for w_ref, b_ref in dec:
        y = jnp.dot(d, w_ref[...], preferred_element_type=jnp.float32) + b_ref[...]
        d = y.astype(jnp.bfloat16)

    # ---- final transposed conv (no BN / activation), lane-dense (B, nc*H*W) f32 ----
    out_ref[...] = jnp.dot(d, wf[...], preferred_element_type=jnp.float32)


def vae_forward(params, x_nchw, eps):
    B = x_nchw.shape[0]
    nz = params["heads"][0].shape[-1] // 2
    x_flat = x_nchw.reshape(B, -1).astype(jnp.float32)   # NCHW row-major flatten
    eps_row = eps.reshape(1, nz).astype(jnp.float32)

    operands = [x_flat, eps_row]
    for w_, b_ in params["enc"]:
        operands += [w_, b_]
    operands += list(params["heads"])
    operands += list(params["dec_lin"])
    for w_, b_ in params["dec"]:
        operands += [w_, b_]
    operands.append(params["dec_final"])

    out_dim = params["dec_final"].shape[-1]
    vmem = pl.BlockSpec(memory_space=pltpu.MemorySpace.VMEM)

    mu, log_var, out_flat = pl.pallas_call(
        functools.partial(_vae_kernel, n_enc=len(params["enc"]),
                          n_dec=len(params["dec"]), nz=nz),
        out_shape=(jax.ShapeDtypeStruct((B, nz), jnp.float32),
                   jax.ShapeDtypeStruct((B, nz), jnp.float32),
                   jax.ShapeDtypeStruct((B, out_dim), jnp.float32)),
        in_specs=[vmem] * len(operands),
        out_specs=(vmem, vmem, vmem),
    )(*operands)

    return mu, log_var, out_flat.reshape(x_nchw.shape)


if __name__ == "__main__":
    INPUT_SIZE, NC, NH, NZ, BATCH = 16, 1, 8, 16, 2

    key = jax.random.PRNGKey(0)
    k_param, k_x, k_eps = jax.random.split(key, 3)

    params = init_vae_params(k_param, input_size=INPUT_SIZE, nc=NC, nh=NH, nz=NZ)
    x = jax.random.normal(k_x, (BATCH, NC, INPUT_SIZE, INPUT_SIZE), jnp.float32)
    epsilon = jax.random.normal(k_eps, (NZ,), jnp.float32)  # replaces np.random.normal(size=nz)

    fwd = jax.jit(vae_forward)
    mu_x, log_var_x, out = fwd(params, x, epsilon)
    jax.block_until_ready((mu_x, log_var_x, out))

    assert mu_x.shape == (BATCH, NZ)
    assert log_var_x.shape == (BATCH, NZ)
    assert out.shape == x.shape
    assert bool(jnp.all(jnp.isfinite(out)))
    print("KERNEL_OK")
</pallas_src>

<mosaic_0001>
module attributes {stable_mosaic.version = 11 : i64} {
  func.func @_vae_kernel(%arg0: memref<2x256xf32, #tpu.memory_space<vmem>>, %arg1: memref<1x16xf32, #tpu.memory_space<vmem>>, %arg2: memref<256x512xbf16, #tpu.memory_space<vmem>>, %arg3: memref<1x512xf32, #tpu.memory_space<vmem>>, %arg4: memref<512x256xbf16, #tpu.memory_space<vmem>>, %arg5: memref<1x256xf32, #tpu.memory_space<vmem>>, %arg6: memref<256x128xbf16, #tpu.memory_space<vmem>>, %arg7: memref<1x128xf32, #tpu.memory_space<vmem>>, %arg8: memref<128x64xbf16, #tpu.memory_space<vmem>>, %arg9: memref<1x64xf32, #tpu.memory_space<vmem>>, %arg10: memref<64x32xbf16, #tpu.memory_space<vmem>>, %arg11: memref<1x32xf32, #tpu.memory_space<vmem>>, %arg12: memref<16x64xbf16, #tpu.memory_space<vmem>>, %arg13: memref<1x64xf32, #tpu.memory_space<vmem>>, %arg14: memref<64x128xbf16, #tpu.memory_space<vmem>>, %arg15: memref<1x128xf32, #tpu.memory_space<vmem>>, %arg16: memref<128x256xbf16, #tpu.memory_space<vmem>>, %arg17: memref<1x256xf32, #tpu.memory_space<vmem>>, %arg18: memref<256x512xbf16, #tpu.memory_space<vmem>>, %arg19: memref<1x512xf32, #tpu.memory_space<vmem>>, %arg20: memref<512x256xbf16, #tpu.memory_space<vmem>>, %arg21: memref<2x16xf32, #tpu.memory_space<vmem>>, %arg22: memref<2x16xf32, #tpu.memory_space<vmem>>, %arg23: memref<2x256xf32, #tpu.memory_space<vmem>>) attributes {dimension_semantics = [], scalar_prefetch = 0 : i64, scratch_operands = 0 : i64, tpu.core_type = #tpu.core_type<tc>} {
    %c0 = arith.constant 0 : index
    %c0_0 = arith.constant 0 : index
    %0 = vector.load %arg0[%c0, %c0_0] : memref<2x256xf32, #tpu.memory_space<vmem>>, vector<2x256xf32>
    %1 = arith.truncf %0 : vector<2x256xf32> to vector<2x256xbf16>
    %c0_1 = arith.constant 0 : index
    %c0_2 = arith.constant 0 : index
    %2 = vector.load %arg2[%c0_1, %c0_2] : memref<256x512xbf16, #tpu.memory_space<vmem>>, vector<256x512xbf16>
    %cst = arith.constant dense<0.000000e+00> : vector<2x512xf32>
    %3 = tpu.matmul %1, %2, %cst {dimension_numbers = #tpu.dot_dimension_numbers<[1], [0], [0], [1], [0, 0, 1, 1], [], []>} : vector<2x256xbf16>, vector<256x512xbf16>, vector<2x512xf32> -> vector<2x512xf32>
    %c0_3 = arith.constant 0 : index
    %c0_4 = arith.constant 0 : index
    %4 = vector.load %arg3[%c0_3, %c0_4] : memref<1x512xf32, #tpu.memory_space<vmem>>, vector<1x512xf32>
    %5 = vector.broadcast %4 : vector<1x512xf32> to vector<2x512xf32>
    %6 = arith.addf %3, %5 : vector<2x512xf32>
    %7 = arith.truncf %6 : vector<2x512xf32> to vector<2x512xbf16>
    %c0_5 = arith.constant 0 : index
    %c0_6 = arith.constant 0 : index
    %8 = vector.load %arg4[%c0_5, %c0_6] : memref<512x256xbf16, #tpu.memory_space<vmem>>, vector<512x256xbf16>
    %cst_7 = arith.constant dense<0.000000e+00> : vector<2x256xf32>
    %9 = tpu.matmul %7, %8, %cst_7 {dimension_numbers = #tpu.dot_dimension_numbers<[1], [0], [0], [1], [0, 0, 1, 1], [], []>} : vector<2x512xbf16>, vector<512x256xbf16>, vector<2x256xf32> -> vector<2x256xf32>
    %c0_8 = arith.constant 0 : index
    %c0_9 = arith.constant 0 : index
    %10 = vector.load %arg5[%c0_8, %c0_9] : memref<1x256xf32, #tpu.memory_space<vmem>>, vector<1x256xf32>
    %11 = vector.broadcast %10 : vector<1x256xf32> to vector<2x256xf32>
    %12 = arith.addf %9, %11 : vector<2x256xf32>
    %13 = arith.truncf %12 : vector<2x256xf32> to vector<2x256xbf16>
    %c0_10 = arith.constant 0 : index
    %c0_11 = arith.constant 0 : index
    %14 = vector.load %arg6[%c0_10, %c0_11] : memref<256x128xbf16, #tpu.memory_space<vmem>>, vector<256x128xbf16>
    %cst_12 = arith.constant dense<0.000000e+00> : vector<2x128xf32>
    %15 = tpu.matmul %13, %14, %cst_12 {dimension_numbers = #tpu.dot_dimension_numbers<[1], [0], [0], [1], [0, 0, 1, 1], [], []>} : vector<2x256xbf16>, vector<256x128xbf16>, vector<2x128xf32> -> vector<2x128xf32>
    %c0_13 = arith.constant 0 : index
    %c0_14 = arith.constant 0 : index
    %16 = vector.load %arg7[%c0_13, %c0_14] : memref<1x128xf32, #tpu.memory_space<vmem>>, vector<1x128xf32>
    %17 = vector.broadcast %16 : vector<1x128xf32> to vector<2x128xf32>
    %18 = arith.addf %15, %17 : vector<2x128xf32>
    %19 = arith.truncf %18 : vector<2x128xf32> to vector<2x128xbf16>
    %c0_15 = arith.constant 0 : index
    %c0_16 = arith.constant 0 : index
    %20 = vector.load %arg8[%c0_15, %c0_16] : memref<128x64xbf16, #tpu.memory_space<vmem>>, vector<128x64xbf16>
    %cst_17 = arith.constant dense<0.000000e+00> : vector<2x64xf32>
    %21 = tpu.matmul %19, %20, %cst_17 {dimension_numbers = #tpu.dot_dimension_numbers<[1], [0], [0], [1], [0, 0, 1, 1], [], []>} : vector<2x128xbf16>, vector<128x64xbf16>, vector<2x64xf32> -> vector<2x64xf32>
    %c0_18 = arith.constant 0 : index
    %c0_19 = arith.constant 0 : index
    %22 = vector.load %arg9[%c0_18, %c0_19] : memref<1x64xf32, #tpu.memory_space<vmem>>, vector<1x64xf32>
    %23 = vector.broadcast %22 : vector<1x64xf32> to vector<2x64xf32>
    %24 = arith.addf %21, %23 : vector<2x64xf32>
    %25 = arith.truncf %24 : vector<2x64xf32> to vector<2x64xbf16>
    %c0_20 = arith.constant 0 : index
    %c0_21 = arith.constant 0 : index
    %26 = vector.load %arg10[%c0_20, %c0_21] : memref<64x32xbf16, #tpu.memory_space<vmem>>, vector<64x32xbf16>
    %cst_22 = arith.constant dense<0.000000e+00> : vector<2x32xf32>
    %27 = tpu.matmul %25, %26, %cst_22 {dimension_numbers = #tpu.dot_dimension_numbers<[1], [0], [0], [1], [0, 0, 1, 1], [], []>} : vector<2x64xbf16>, vector<64x32xbf16>, vector<2x32xf32> -> vector<2x32xf32>
    %c0_23 = arith.constant 0 : index
    %c0_24 = arith.constant 0 : index
    %28 = vector.load %arg11[%c0_23, %c0_24] : memref<1x32xf32, #tpu.memory_space<vmem>>, vector<1x32xf32>
    %29 = vector.broadcast %28 : vector<1x32xf32> to vector<2x32xf32>
    %30 = arith.addf %27, %29 : vector<2x32xf32>
    %cst_25 = arith.constant 0.000000e+00 : f32
    %31 = vector.broadcast %cst_25 : f32 to vector<2x32xf32>
    %32 = arith.cmpf oge, %30, %31 : vector<2x32xf32>
    %cst_26 = arith.constant 0.00999999977 : f32
    %33 = vector.broadcast %cst_26 : f32 to vector<2x32xf32>
    %34 = arith.mulf %33, %30 : vector<2x32xf32>
    %35 = arith.select %32, %30, %34 : vector<2x32xi1>, vector<2x32xf32>
    %36 = vector.extract_strided_slice %35 {offsets = [0, 0], sizes = [2, 16], strides = [1, 1]} : vector<2x32xf32> to vector<2x16xf32>
    %37 = vector.extract_strided_slice %35 {offsets = [0, 16], sizes = [2, 16], strides = [1, 1]} : vector<2x32xf32> to vector<2x16xf32>
    %c0_27 = arith.constant 0 : index
    %c0_28 = arith.constant 0 : index
    %38 = vector.load %arg21[%c0_27, %c0_28] : memref<2x16xf32, #tpu.memory_space<vmem>>, vector<2x16xf32>
    tpu.vector_store %arg21[%c0_27, %c0_28], %36 {strides = array<i32>} : memref<2x16xf32, #tpu.memory_space<vmem>>, vector<2x16xf32>,
    %c0_29 = arith.constant 0 : index
    %c0_30 = arith.constant 0 : index
    %39 = vector.load %arg22[%c0_29, %c0_30] : memref<2x16xf32, #tpu.memory_space<vmem>>, vector<2x16xf32>
    tpu.vector_store %arg22[%c0_29, %c0_30], %37 {strides = array<i32>} : memref<2x16xf32, #tpu.memory_space<vmem>>, vector<2x16xf32>,
    %c0_31 = arith.constant 0 : index
    %c0_32 = arith.constant 0 : index
    %40 = vector.load %arg1[%c0_31, %c0_32] : memref<1x16xf32, #tpu.memory_space<vmem>>, vector<1x16xf32>
    %cst_33 = arith.constant 5.000000e-01 : f32
    %41 = vector.broadcast %cst_33 : f32 to vector<2x16xf32>
    %42 = arith.mulf %41, %37 : vector<2x16xf32>
    %43 = math.exp %42 : vector<2x16xf32>
    %44 = vector.broadcast %40 : vector<1x16xf32> to vector<2x16xf32>
    %45 = arith.mulf %44, %43 : vector<2x16xf32>
    %46 = arith.addf %36, %45 : vector<2x16xf32>
    %47 = arith.truncf %46 : vector<2x16xf32> to vector<2x16xbf16>
    %c0_34 = arith.constant 0 : index
    %c0_35 = arith.constant 0 : index
    %48 = vector.load %arg12[%c0_34, %c0_35] : memref<16x64xbf16, #tpu.memory_space<vmem>>, vector<16x64xbf16>
    %cst_36 = arith.constant dense<0.000000e+00> : vector<2x64xf32>
    %49 = tpu.matmul %47, %48, %cst_36 {dimension_numbers = #tpu.dot_dimension_numbers<[1], [0], [0], [1], [0, 0, 1, 1], [], []>} : vector<2x16xbf16>, vector<16x64xbf16>, vector<2x64xf32> -> vector<2x64xf32>
    %c0_37 = arith.constant 0 : index
    %c0_38 = arith.constant 0 : index
    %50 = vector.load %arg13[%c0_37, %c0_38] : memref<1x64xf32, #tpu.memory_space<vmem>>, vector<1x64xf32>
    %51 = vector.broadcast %50 : vector<1x64xf32> to vector<2x64xf32>
    %52 = arith.addf %49, %51 : vector<2x64xf32>
    %cst_39 = arith.constant 0.000000e+00 : f32
    %53 = vector.broadcast %cst_39 : f32 to vector<2x64xf32>
    %54 = arith.cmpf oge, %52, %53 : vector<2x64xf32>
    %cst_40 = arith.constant 0.00999999977 : f32
    %55 = vector.broadcast %cst_40 : f32 to vector<2x64xf32>
    %56 = arith.mulf %55, %52 : vector<2x64xf32>
    %57 = arith.select %54, %52, %56 : vector<2x64xi1>, vector<2x64xf32>
    %58 = arith.truncf %57 : vector<2x64xf32> to vector<2x64xbf16>
    %c0_41 = arith.constant 0 : index
    %c0_42 = arith.constant 0 : index
    %59 = vector.load %arg14[%c0_41, %c0_42] : memref<64x128xbf16, #tpu.memory_space<vmem>>, vector<64x128xbf16>
    %cst_43 = arith.constant dense<0.000000e+00> : vector<2x128xf32>
    %60 = tpu.matmul %58, %59, %cst_43 {dimension_numbers = #tpu.dot_dimension_numbers<[1], [0], [0], [1], [0, 0, 1, 1], [], []>} : vector<2x64xbf16>, vector<64x128xbf16>, vector<2x128xf32> -> vector<2x128xf32>
    %c0_44 = arith.constant 0 : index
    %c0_45 = arith.constant 0 : index
    %61 = vector.load %arg15[%c0_44, %c0_45] : memref<1x128xf32, #tpu.memory_space<vmem>>, vector<1x128xf32>
    %62 = vector.broadcast %61 : vector<1x128xf32> to vector<2x128xf32>
    %63 = arith.addf %60, %62 : vector<2x128xf32>
    %64 = arith.truncf %63 : vector<2x128xf32> to vector<2x128xbf16>
    %c0_46 = arith.constant 0 : index
    %c0_47 = arith.constant 0 : index
    %65 = vector.load %arg16[%c0_46, %c0_47] : memref<128x256xbf16, #tpu.memory_space<vmem>>, vector<128x256xbf16>
    %cst_48 = arith.constant dense<0.000000e+00> : vector<2x256xf32>
    %66 = tpu.matmul %64, %65, %cst_48 {dimension_numbers = #tpu.dot_dimension_numbers<[1], [0], [0], [1], [0, 0, 1, 1], [], []>} : vector<2x128xbf16>, vector<128x256xbf16>, vector<2x256xf32> -> vector<2x256xf32>
    %c0_49 = arith.constant 0 : index
    %c0_50 = arith.constant 0 : index
    %67 = vector.load %arg17[%c0_49, %c0_50] : memref<1x256xf32, #tpu.memory_space<vmem>>, vector<1x256xf32>
    %68 = vector.broadcast %67 : vector<1x256xf32> to vector<2x256xf32>
    %69 = arith.addf %66, %68 : vector<2x256xf32>
    %70 = arith.truncf %69 : vector<2x256xf32> to vector<2x256xbf16>
    %c0_51 = arith.constant 0 : index
    %c0_52 = arith.constant 0 : index
    %71 = vector.load %arg18[%c0_51, %c0_52] : memref<256x512xbf16, #tpu.memory_space<vmem>>, vector<256x512xbf16>
    %cst_53 = arith.constant dense<0.000000e+00> : vector<2x512xf32>
    %72 = tpu.matmul %70, %71, %cst_53 {dimension_numbers = #tpu.dot_dimension_numbers<[1], [0], [0], [1], [0, 0, 1, 1], [], []>} : vector<2x256xbf16>, vector<256x512xbf16>, vector<2x512xf32> -> vector<2x512xf32>
    %c0_54 = arith.constant 0 : index
    %c0_55 = arith.constant 0 : index
    %73 = vector.load %arg19[%c0_54, %c0_55] : memref<1x512xf32, #tpu.memory_space<vmem>>, vector<1x512xf32>
    %74 = vector.broadcast %73 : vector<1x512xf32> to vector<2x512xf32>
    %75 = arith.addf %72, %74 : vector<2x512xf32>
    %76 = arith.truncf %75 : vector<2x512xf32> to vector<2x512xbf16>
    %c0_56 = arith.constant 0 : index
    %c0_57 = arith.constant 0 : index
    %77 = vector.load %arg20[%c0_56, %c0_57] : memref<512x256xbf16, #tpu.memory_space<vmem>>, vector<512x256xbf16>
    %cst_58 = arith.constant dense<0.000000e+00> : vector<2x256xf32>
    %78 = tpu.matmul %76, %77, %cst_58 {dimension_numbers = #tpu.dot_dimension_numbers<[1], [0], [0], [1], [0, 0, 1, 1], [], []>} : vector<2x512xbf16>, vector<512x256xbf16>, vector<2x256xf32> -> vector<2x256xf32>
    %c0_59 = arith.constant 0 : index
    %c0_60 = arith.constant 0 : index
    %79 = vector.load %arg23[%c0_59, %c0_60] : memref<2x256xf32, #tpu.memory_space<vmem>>, vector<2x256xf32>
    tpu.vector_store %arg23[%c0_59, %c0_60], %78 {strides = array<i32>} : memref<2x256xf32, #tpu.memory_space<vmem>>, vector<2x256xf32>,
    return
  }
}

</mosaic_0001>

<llo_original>
// kernel: vae_forward.1
$region0: #{vae_forward.1}
  #allocation0 [shape = 'u32[]', space=smem, size = 0x4, offset = 0x4, fixed_abs, tag = 'smem constant byte address 0x4 - core index']
  #allocation1 [shape = 'u32[144,128]{1,0:T(1,128)}', space=vmem, size = 0x12000, scoped, tag = 'internal scratch']
  %s0 = inlined_call_operand.vmem [shape: f32[2,256], index: 0, kind: input, shape index: {}]
  %s1 = inlined_call_operand.vmem [shape: f32[1,16], index: 1, kind: input, shape index: {}]
  %s2 = inlined_call_operand.hbm [shape: bf16[256,512], index: 2, kind: input, shape index: {}]
  %s3 = inlined_call_operand.vmem [shape: f32[1,512], index: 3, kind: input, shape index: {}]
  %s4 = inlined_call_operand.hbm [shape: bf16[512,256], index: 4, kind: input, shape index: {}]
  %s5 = inlined_call_operand.hbm [shape: f32[1,256], index: 5, kind: input, shape index: {}]
  %s6 = inlined_call_operand.vmem [shape: bf16[256,128], index: 6, kind: input, shape index: {}]
  %s7 = inlined_call_operand.hbm [shape: f32[1,128], index: 7, kind: input, shape index: {}]
  %s8 = inlined_call_operand.vmem [shape: bf16[128,64], index: 8, kind: input, shape index: {}]
  %s9 = inlined_call_operand.hbm [shape: f32[1,64], index: 9, kind: input, shape index: {}]
  %s10 = inlined_call_operand.vmem [shape: bf16[64,32], index: 10, kind: input, shape index: {}]
  %s11 = inlined_call_operand.vmem [shape: f32[1,32], index: 11, kind: input, shape index: {}]
  %s12 = inlined_call_operand.hbm [shape: bf16[16,64], index: 12, kind: input, shape index: {}]
  %s13 = inlined_call_operand.hbm [shape: f32[1,64], index: 13, kind: input, shape index: {}]
  %s14 = inlined_call_operand.vmem [shape: bf16[64,128], index: 14, kind: input, shape index: {}]
  %s15 = inlined_call_operand.hbm [shape: f32[1,128], index: 15, kind: input, shape index: {}]
  %s16 = inlined_call_operand.hbm [shape: bf16[128,256], index: 16, kind: input, shape index: {}]
  %s17 = inlined_call_operand.hbm [shape: f32[1,256], index: 17, kind: input, shape index: {}]
  %s18 = inlined_call_operand.hbm [shape: bf16[256,512], index: 18, kind: input, shape index: {}]
  %s19 = inlined_call_operand.hbm [shape: f32[1,512], index: 19, kind: input, shape index: {}]
  %s20 = inlined_call_operand.hbm [shape: bf16[512,256], index: 20, kind: input, shape index: {}]
  %s21 = inlined_call_operand.hbm [shape: f32[2,16], index: 21, kind: output, shape index: {0}]
  %s22 = inlined_call_operand.hbm [shape: f32[2,16], index: 22, kind: output, shape index: {1}]
  %s23 = inlined_call_operand.vmem [shape: f32[2,256], index: 23, kind: output, shape index: {2}]
  %24 = xla_tuple %s21, %s22, %s23
  %s25 = sld [smem:[#allocation0]]
  $region162: #{vae_forward.1} parent=0
    _
  %s27 = ssub.s32 1, %s25
  %s28 = scalar_select 0, %s27, %s25
  $region1: #{vae_forward.1} parent=0
    #allocation2 [shape = 'u8[262144]{0}', space=vmem, size = 0x40000, scoped, tag = 'input window, operand 2, single buffered']
    #allocation3 [shape = 's32[1]{0}', space=sflag, size = 0x4, scoped, tag = 'scoped memory for vae_forward.1']
    #allocation4 [shape = 's32[1]{0}', space=sflag, size = 0x4, scoped, tag = 'scoped memory for vae_forward.1']
    #allocation5 [shape = 'u8[262144]{0}', space=vmem, size = 0x40000, scoped, tag = 'input window, operand 4, single buffered']
    #allocation6 [shape = 's32[1]{0}', space=sflag, size = 0x4, scoped, tag = 'scoped memory for vae_forward.1']
    #allocation7 [shape = 'u8[1024]{0}', space=vmem, size = 0x400, scoped, tag = 'input window, operand 5, single buffered']
    #allocation8 [shape = 'u8[512]{0}', space=vmem, size = 0x400, scoped, tag = 'input window, operand 7, single buffered']
    #allocation9 [shape = 's32[1]{0}', space=sflag, size = 0x4, scoped, tag = 'scoped memory for vae_forward.1']
    #allocation10 [shape = 'u8[512]{0}', space=vmem, size = 0x400, scoped, tag = 'input window, operand 9, single buffered']
    #allocation11 [shape = 'u8[4096]{0}', space=vmem, size = 0x1000, scoped, tag = 'input window, operand 12, single buffered']
    #allocation12 [shape = 's32[1]{0}', space=sflag, size = 0x4, scoped, tag = 'scoped memory for vae_forward.1']
    #allocation13 [shape = 'u8[512]{0}', space=vmem, size = 0x400, scoped, tag = 'input window, operand 13, single buffered']
    #allocation14 [shape = 'u8[512]{0}', space=vmem, size = 0x400, scoped, tag = 'input window, operand 15, single buffered']
    #allocation15 [shape = 's32[1]{0}', space=sflag, size = 0x4, scoped, tag = 'scoped memory for vae_forward.1']
    #allocation16 [shape = 'u8[65536]{0}', space=vmem, size = 0x10000, scoped, tag = 'input window, operand 16, single buffered']
    #allocation17 [shape = 'u8[1024]{0}', space=vmem, size = 0x400, scoped, tag = 'input window, operand 17, single buffered']
    #allocation18 [shape = 's32[1]{0}', space=sflag, size = 0x4, scoped, tag = 'scoped memory for vae_forward.1']
    #allocation19 [shape = 'u8[262144]{0}', space=vmem, size = 0x40000, scoped, tag = 'input window, operand 18, single buffered']
    #allocation20 [shape = 'u8[2048]{0}', space=vmem, size = 0x800, scoped, tag = 'input window, operand 19, single buffered']
    #allocation21 [shape = 's32[1]{0}', space=sflag, size = 0x4, scoped, tag = 'scoped memory for vae_forward.1']
    #allocation22 [shape = 'u8[262144]{0}', space=vmem, size = 0x40000, scoped, tag = 'input window, operand 20, single buffered']
    #allocation23 [shape = 'u8[1024]{0}', space=vmem, size = 0x400, scoped, tag = 'output window, operand 0, single buffered']
    #allocation24 [shape = 'u8[1024]{0}', space=vmem, size = 0x400, scoped, tag = 'output window, operand 1, single buffered']
    #allocation25 [shape = 's32[1]{0}', space=sflag, size = 0x4, scoped, tag = 'scoped memory for vae_forward.1']
    %29 = vsyncpa [#allocation3], 0
    %30 = vsyncpa [#allocation6], 0
    %31 = vsyncpa [#allocation9], 0
    %32 = vsyncpa [#allocation12], 0
    %33 = vsyncpa [#allocation15], 0
    %34 = vsyncpa [#allocation18], 0
    %35 = vsyncpa [#allocation21], 0
    %36 = vsyncpa [#allocation4], 0
    %37 = vsyncpa [#allocation25], 0
    // Predicated region
    $region2: #{vae_forward.1} parent=1 // pred_check
      _
    $region3: #{vae_forward.1} parent=1 // pred_check_branch
      %39 = sbr.rel (0) target = $region5
    $region4: #{vae_forward.1} parent=1 // pred_region
      _
    $region5: #{vae_forward.1} parent=1 // pred_fallthru
      _
    // Predicated region
    $region6: #{vae_forward.1} parent=1 // pred_check
      _
    $region7: #{vae_forward.1} parent=1 // pred_check_branch
      %41 = sbr.rel (0) target = $region9
    $region8: #{vae_forward.1} parent=1 // pred_region
      _
    $region9: #{vae_forward.1} parent=1 // pred_fallthru
      _
    // Predicated region
    $region10: #{vae_forward.1} parent=1 // pred_check
      _
    $region11: #{vae_forward.1} parent=1 // pred_check_branch
      %43 = sbr.rel (0) target = $region13
    $region12: #{vae_forward.1} parent=1 // pred_region
      %s45 = ssub.s32 8192, 8192
      %46 = vsyncadd [#allocation3], %s45
      %s47 = sshll.u32 [#allocation2], 4
      %s48 = int_to_ptr.vmem [resolvable:$true] %s47
      %53 = dma.hbm_to_vmem [thread:$0]  %s2, 8192, %s48, [#allocation3], 256, 256, 16
    $region13: #{vae_forward.1} parent=1 // pred_fallthru
      _
    // Predicated region
    $region14: #{vae_forward.1} parent=1 // pred_check
      _
    $region15: #{vae_forward.1} parent=1 // pred_check_branch
      %55 = sbr.rel (0) target = $region17
    $region16: #{vae_forward.1} parent=1 // pred_region
      _
    $region17: #{vae_forward.1} parent=1 // pred_fallthru
      _
    // Predicated region
    $region18: #{vae_forward.1} parent=1 // pred_check
      _
    $region19: #{vae_forward.1} parent=1 // pred_check_branch
      %57 = sbr.rel (0) target = $region21
    $region20: #{vae_forward.1} parent=1 // pred_region
      %s59 = ssub.s32 8192, 8192
      %60 = vsyncadd [#allocation6], %s59
      %s61 = sshll.u32 [#allocation5], 4
      %s62 = int_to_ptr.vmem [resolvable:$true] %s61
      %67 = dma.hbm_to_vmem [thread:$0]  %s4, 8192, %s62, [#allocation6], 128, 128, 8
    $region21: #{vae_forward.1} parent=1 // pred_fallthru
      _
    // Predicated region
    $region22: #{vae_forward.1} parent=1 // pred_check
      _
    $region23: #{vae_forward.1} parent=1 // pred_check_branch
      %69 = sbr.rel (0) target = $region25
    $region24: #{vae_forward.1} parent=1 // pred_region
      %s71 = ssub.s32 32, 32
      %72 = vsyncadd [#allocation6], %s71
      %s74 = sshll.u32 [#allocation7], 4
      %s75 = int_to_ptr.vmem [resolvable:$true] %s74
      %77 = dma.hbm_to_vmem [thread:$0]  %s5, 32, %s75, [#allocation6]
    $region25: #{vae_forward.1} parent=1 // pred_fallthru
      _
    // Predicated region
    $region26: #{vae_forward.1} parent=1 // pred_check
      _
    $region27: #{vae_forward.1} parent=1 // pred_check_branch
      %79 = sbr.rel (0) target = $region29
    $region28: #{vae_forward.1} parent=1 // pred_region
      _
    $region29: #{vae_forward.1} parent=1 // pred_fallthru
      _
    // Predicated region
    $region30: #{vae_forward.1} parent=1 // pred_check
      _
    $region31: #{vae_forward.1} parent=1 // pred_check_branch
      %81 = sbr.rel (0) target = $region33
    $region32: #{vae_forward.1} parent=1 // pred_region
      %s83 = ssub.s32 16, 16
      %84 = vsyncadd [#allocation9], %s83
      %s86 = sshll.u32 [#allocation8], 4
      %s87 = int_to_ptr.vmem [resolvable:$true] %s86
      %89 = dma.hbm_to_vmem [thread:$0]  %s7, 16, %s87, [#allocation9]
    $region33: #{vae_forward.1} parent=1 // pred_fallthru
      _
    // Predicated region
    $region34: #{vae_forward.1} parent=1 // pred_check
      _
    $region35: #{vae_forward.1} parent=1 // pred_check_branch
      %91 = sbr.rel (0) target = $region37
    $region36: #{vae_forward.1} parent=1 // pred_region
      _
    $region37: #{vae_forward.1} parent=1 // pred_fallthru
      _
    // Predicated region
    $region38: #{vae_forward.1} parent=1 // pred_check
      _
    $region39: #{vae_forward.1} parent=1 // pred_check_branch
      %93 = sbr.rel (0) target = $region41
    $region40: #{vae_forward.1} parent=1 // pred_region
      %s95 = ssub.s32 16, 16
      %96 = vsyncadd [#allocation9], %s95
      %s98 = sshll.u32 [#allocation10], 4
      %s99 = int_to_ptr.vmem [resolvable:$true] %s98
      %101 = dma.hbm_to_vmem [thread:$0]  %s9, 16, %s99, [#allocation9]
    $region41: #{vae_forward.1} parent=1 // pred_fallthru
      _
    // Predicated region
    $region42: #{vae_forward.1} parent=1 // pred_check
      _
    $region43: #{vae_forward.1} parent=1 // pred_check_branch
      %103 = sbr.rel (0) target = $region45
    $region44: #{vae_forward.1} parent=1 // pred_region
      _
    $region45: #{vae_forward.1} parent=1 // pred_fallthru
      _
    // Predicated region
    $region46: #{vae_forward.1} parent=1 // pred_check
      _
    $region47: #{vae_forward.1} parent=1 // pred_check_branch
      %105 = sbr.rel (0) target = $region49
    $region48: #{vae_forward.1} parent=1 // pred_region
      _
    $region49: #{vae_forward.1} parent=1 // pred_fallthru
      _
    // Predicated region
    $region50: #{vae_forward.1} parent=1 // pred_check
      _
    $region51: #{vae_forward.1} parent=1 // pred_check_branch
      %107 = sbr.rel (0) target = $region53
    $region52: #{vae_forward.1} parent=1 // pred_region
      %s109 = ssub.s32 128, 128
      %110 = vsyncadd [#allocation12], %s109
      %s111 = sshll.u32 [#allocation11], 4
      %s112 = int_to_ptr.vmem [resolvable:$true] %s111
      %117 = dma.hbm_to_vmem [thread:$0]  %s12, 128, %s112, [#allocation12], 64, 64, 4
    $region53: #{vae_forward.1} parent=1 // pred_fallthru
      _
    // Predicated region
    $region54: #{vae_forward.1} parent=1 // pred_check
      _
    $region55: #{vae_forward.1} parent=1 // pred_check_branch
      %119 = sbr.rel (0) target = $region57
    $region56: #{vae_forward.1} parent=1 // pred_region
      %s121 = ssub.s32 16, 16
      %122 = vsyncadd [#allocation12], %s121
      %s124 = sshll.u32 [#allocation13], 4
      %s125 = int_to_ptr.vmem [resolvable:$true] %s124
      %127 = dma.hbm_to_vmem [thread:$0]  %s13, 16, %s125, [#allocation12]
    $region57: #{vae_forward.1} parent=1 // pred_fallthru
      _
    // Predicated region
    $region58: #{vae_forward.1} parent=1 // pred_check
      _
    $region59: #{vae_forward.1} parent=1 // pred_check_branch
      %129 = sbr.rel (0) target = $region61
    $region60: #{vae_forward.1} parent=1 // pred_region
      _
    $region61: #{vae_forward.1} parent=1 // pred_fallthru
      _
    // Predicated region
    $region62: #{vae_forward.1} parent=1 // pred_check
      _
    $region63: #{vae_forward.1} parent=1 // pred_check_branch
      %131 = sbr.rel (0) target = $region65
    $region64: #{vae_forward.1} parent=1 // pred_region
      %s133 = ssub.s32 16, 16
      %134 = vsyncadd [#allocation15], %s133
      %s136 = sshll.u32 [#allocation14], 4
      %s137 = int_to_ptr.vmem [resolvable:$true] %s136
      %139 = dma.hbm_to_vmem [thread:$0]  %s15, 16, %s137, [#allocation15]
    $region65: #{vae_forward.1} parent=1 // pred_fallthru
      _
    // Predicated region
    $region66: #{vae_forward.1} parent=1 // pred_check
      _
    $region67: #{vae_forward.1} parent=1 // pred_check_branch
      %141 = sbr.rel (0) target = $region69
    $region68: #{vae_forward.1} parent=1 // pred_region
      %s143 = ssub.s32 2048, 2048
      %144 = vsyncadd [#allocation15], %s143
      %s145 = sshll.u32 [#allocation16], 4
      %s146 = int_to_ptr.vmem [resolvable:$true] %s145
      %151 = dma.hbm_to_vmem [thread:$0]  %s16, 2048, %s146, [#allocation15], 128, 128, 8
    $region69: #{vae_forward.1} parent=1 // pred_fallthru
      _
    // Predicated region
    $region70: #{vae_forward.1} parent=1 // pred_check
      _
    $region71: #{vae_forward.1} parent=1 // pred_check_branch
      %153 = sbr.rel (0) target = $region73
    $region72: #{vae_forward.1} parent=1 // pred_region
      %s155 = ssub.s32 32, 32
      %156 = vsyncadd [#allocation18], %s155
      %s158 = sshll.u32 [#allocation17], 4
      %s159 = int_to_ptr.vmem [resolvable:$true] %s158
      %161 = dma.hbm_to_vmem [thread:$0]  %s17, 32, %s159, [#allocation18]
    $region73: #{vae_forward.1} parent=1 // pred_fallthru
      _
    // Predicated region
    $region74: #{vae_forward.1} parent=1 // pred_check
      _
    $region75: #{vae_forward.1} parent=1 // pred_check_branch
      %163 = sbr.rel (0) target = $region77
    $region76: #{vae_forward.1} parent=1 // pred_region
      %s165 = ssub.s32 8192, 8192
      %166 = vsyncadd [#allocation18], %s165
      %s167 = sshll.u32 [#allocation19], 4
      %s168 = int_to_ptr.vmem [resolvable:$true] %s167
      %173 = dma.hbm_to_vmem [thread:$0]  %s18, 8192, %s168, [#allocation18], 256, 256, 16
    $region77: #{vae_forward.1} parent=1 // pred_fallthru
      _
    // Predicated region
    $region78: #{vae_forward.1} parent=1 // pred_check
      _
    $region79: #{vae_forward.1} parent=1 // pred_check_branch
      %175 = sbr.rel (0) target = $region81
    $region80: #{vae_forward.1} parent=1 // pred_region
      %s177 = ssub.s32 64, 64
      %178 = vsyncadd [#allocation21], %s177
      %s180 = sshll.u32 [#allocation20], 4
      %s181 = int_to_ptr.vmem [resolvable:$true] %s180
      %183 = dma.hbm_to_vmem [thread:$0]  %s19, 64, %s181, [#allocation21]
    $region81: #{vae_forward.1} parent=1 // pred_fallthru
      _
    // Predicated region
    $region82: #{vae_forward.1} parent=1 // pred_check
      _
    $region83: #{vae_forward.1} parent=1 // pred_check_branch
      %185 = sbr.rel (0) target = $region85
    $region84: #{vae_forward.1} parent=1 // pred_region
      %s187 = ssub.s32 8192, 8192
      %188 = vsyncadd [#allocation21], %s187
      %s189 = sshll.u32 [#allocation22], 4
      %s190 = int_to_ptr.vmem [resolvable:$true] %s189
      %195 = dma.hbm_to_vmem [thread:$0]  %s20, 8192, %s190, [#allocation21], 128, 128, 8
    $region85: #{vae_forward.1} parent=1 // pred_fallthru
      _
    // Predicated region
    $region86: #{vae_forward.1} parent=1 // pred_check
      _
    $region87: #{vae_forward.1} parent=1 // pred_check_branch
      %197 = sbr.rel (0) target = $region89
    $region88: #{vae_forward.1} parent=1 // pred_region
      %198 = dma.done [#allocation3], 8192
    $region89: #{vae_forward.1} parent=1 // pred_fallthru
      _
    // Predicated region
    $region90: #{vae_forward.1} parent=1 // pred_check
      _
    $region91: #{vae_forward.1} parent=1 // pred_check_branch
      %200 = sbr.rel (0) target = $region93
    $region92: #{vae_forward.1} parent=1 // pred_region
      %201 = dma.done [#allocation6], 8192
    $region93: #{vae_forward.1} parent=1 // pred_fallthru
      _
    // Predicated region
    $region94: #{vae_forward.1} parent=1 // pred_check
      _
    $region95: #{vae_forward.1} parent=1 // pred_check_branch
      %203 = sbr.rel (0) target = $region97
    $region96: #{vae_forward.1} parent=1 // pred_region
      %204 = dma.done [#allocation6], 32
    $region97: #{vae_forward.1} parent=1 // pred_fallthru
      _
    // Predicated region
    $region98: #{vae_forward.1} parent=1 // pred_check
      _
    $region99: #{vae_forward.1} parent=1 // pred_check_branch
      %206 = sbr.rel (0) target = $region101
    $region100: #{vae_forward.1} parent=1 // pred_region
      %207 = dma.done [#allocation9], 16
    $region101: #{vae_forward.1} parent=1 // pred_fallthru
      _
    // Predicated region
    $region102: #{vae_forward.1} parent=1 // pred_check
      _
    $region103: #{vae_forward.1} parent=1 // pred_check_branch
      %209 = sbr.rel (0) target = $region105
    $region104: #{vae_forward.1} parent=1 // pred_region
      %210 = dma.done [#allocation9], 16
    $region105: #{vae_forward.1} parent=1 // pred_fallthru
      _
    // Predicated region
    $region106: #{vae_forward.1} parent=1 // pred_check
      _
    $region107: #{vae_forward.1} parent=1 // pred_check_branch
      %212 = sbr.rel (0) target = $region109
    $region108: #{vae_forward.1} parent=1 // pred_region
      %213 = dma.done [#allocation12], 128
    $region109: #{vae_forward.1} parent=1 // pred_fallthru
      _
    // Predicated region
    $region110: #{vae_forward.1} parent=1 // pred_check
      _
    $region111: #{vae_forward.1} parent=1 // pred_check_branch
      %215 = sbr.rel (0) target = $region113
    $region112: #{vae_forward.1} parent=1 // pred_region
      %216 = dma.done [#allocation12], 16
    $region113: #{vae_forward.1} parent=1 // pred_fallthru
      _
    // Predicated region
    $region114: #{vae_forward.1} parent=1 // pred_check
      _
    $region115: #{vae_forward.1} parent=1 // pred_check_branch
      %218 = sbr.rel (0) target = $region117
    $region116: #{vae_forward.1} parent=1 // pred_region
      %219 = dma.done [#allocation15], 16
    $region117: #{vae_forward.1} parent=1 // pred_fallthru
      _
    // Predicated region
    $region118: #{vae_forward.1} parent=1 // pred_check
      _
    $region119: #{vae_forward.1} parent=1 // pred_check_branch
      %221 = sbr.rel (0) target = $region121
    $region120: #{vae_forward.1} parent=1 // pred_region
      %222 = dma.done [#allocation15], 2048
    $region121: #{vae_forward.1} parent=1 // pred_fallthru
      _
    // Predicated region
    $region122: #{vae_forward.1} parent=1 // pred_check
      _
    $region123: #{vae_forward.1} parent=1 // pred_check_branch
      %224 = sbr.rel (0) target = $region125
    $region124: #{vae_forward.1} parent=1 // pred_region
      %225 = dma.done [#allocation18], 32
    $region125: #{vae_forward.1} parent=1 // pred_fallthru
      _
    // Predicated region
    $region126: #{vae_forward.1} parent=1 // pred_check
      _
    $region127: #{vae_forward.1} parent=1 // pred_check_branch
      %227 = sbr.rel (0) target = $region129
    $region128: #{vae_forward.1} parent=1 // pred_region
      %228 = dma.done [#allocation18], 8192
    $region129: #{vae_forward.1} parent=1 // pred_fallthru
      _
    // Predicated region
    $region130: #{vae_forward.1} parent=1 // pred_check
      _
    $region131: #{vae_forward.1} parent=1 // pred_check_branch
      %230 = sbr.rel (0) target = $region133
    $region132: #{vae_forward.1} parent=1 // pred_region
      %231 = dma.done [#allocation21], 64
    $region133: #{vae_forward.1} parent=1 // pred_fallthru
      _
    // Predicated region
    $region134: #{vae_forward.1} parent=1 // pred_check
      _
    $region135: #{vae_forward.1} parent=1 // pred_check_branch
      %233 = sbr.rel (0) target = $region137
    $region136: #{vae_forward.1} parent=1 // pred_region
      %234 = dma.done [#allocation21], 8192
    $region137: #{vae_forward.1} parent=1 // pred_fallthru
      _
    %v236 = vld [vmem:[%s0] sm:$0xf]
    %v239 = vunpack.c.l.s4 1983009808
    %v240 = vunpack.c.0.s8 %v239
    %v241 = vlaneseq
    %v242 = vshrl.u32 %v241, 7
    %v243 = vsub.s32 %v240, %v242
    %v244 = vrot.slane %v236, %v243
    %v245 = vcombine.high %v244, %v244
    %v248 = vpack.c.bf16 %v244, %v244
    %v249 = vpack.c.bf16 %v245, %v245
    %v250 = vld [vmem:[#allocation2] sm:$0xff]
    %v251 = vld [vmem:[#allocation2 + $0x8] sm:$0xff]
    %v252 = vld [vmem:[#allocation2 + $0x10] sm:$0xff]
    %v253 = vld [vmem:[#allocation2 + $0x18] sm:$0xff]
    %v254 = vld [vmem:[#allocation2 + $0x20] sm:$0xff]
    %v255 = vld [vmem:[#allocation2 + $0x28] sm:$0xff]
    %v256 = vld [vmem:[#allocation2 + $0x30] sm:$0xff]
    %v257 = vld [vmem:[#allocation2 + $0x38] sm:$0xff]
    %v258 = vld [vmem:[#allocation2 + $0x40] sm:$0xff]
    %v259 = vld [vmem:[#allocation2 + $0x48] sm:$0xff]
    %v260 = vld [vmem:[#allocation2 + $0x50] sm:$0xff]
    %v261 = vld [vmem:[#allocation2 + $0x58] sm:$0xff]
    %v262 = vld [vmem:[#allocation2 + $0x60] sm:$0xff]
    %v263 = vld [vmem:[#allocation2 + $0x68] sm:$0xff]
    %v264 = vld [vmem:[#allocation2 + $0x70] sm:$0xff]
    %v265 = vld [vmem:[#allocation2 + $0x78] sm:$0xff]
    %v266 = vld [vmem:[#allocation2 + $0x80] sm:$0xff]
    %v267 = vld [vmem:[#allocation2 + $0x88] sm:$0xff]
    %v268 = vld [vmem:[#allocation2 + $0x90] sm:$0xff]
    %v269 = vld [vmem:[#allocation2 + $0x98] sm:$0xff]
    %v270 = vld [vmem:[#allocation2 + $0xa0] sm:$0xff]
    %v271 = vld [vmem:[#allocation2 + $0xa8] sm:$0xff]
    %v272 = vld [vmem:[#allocation2 + $0xb0] sm:$0xff]
    %v273 = vld [vmem:[#allocation2 + $0xb8] sm:$0xff]
    %v274 = vld [vmem:[#allocation2 + $0xc0] sm:$0xff]
    %v275 = vld [vmem:[#allocation2 + $0xc8] sm:$0xff]
    %v276 = vld [vmem:[#allocation2 + $0xd0] sm:$0xff]
    %v277 = vld [vmem:[#allocation2 + $0xd8] sm:$0xff]
    %v278 = vld [vmem:[#allocation2 + $0xe0] sm:$0xff]
    %v279 = vld [vmem:[#allocation2 + $0xe8] sm:$0xff]
    %v280 = vld [vmem:[#allocation2 + $0xf0] sm:$0xff]
    %v281 = vld [vmem:[#allocation2 + $0xf8] sm:$0xff]
    %v282 = vld [vmem:[#allocation2 + $0x100] sm:$0xff]
    %v283 = vld [vmem:[#allocation2 + $0x108] sm:$0xff]
    %v284 = vld [vmem:[#allocation2 + $0x110] sm:$0xff]
    %v285 = vld [vmem:[#allocation2 + $0x118] sm:$0xff]
    %v286 = vld [vmem:[#allocation2 + $0x120] sm:$0xff]
    %v287 = vld [vmem:[#allocation2 + $0x128] sm:$0xff]
    %v288 = vld [vmem:[#allocation2 + $0x130] sm:$0xff]
    %v289 = vld [vmem:[#allocation2 + $0x138] sm:$0xff]
    %v290 = vld [vmem:[#allocation2 + $0x140] sm:$0xff]
    %v291 = vld [vmem:[#allocation2 + $0x148] sm:$0xff]
    %v292 = vld [vmem:[#allocation2 + $0x150] sm:$0xff]
    %v293 = vld [vmem:[#allocation2 + $0x158] sm:$0xff]
    %v294 = vld [vmem:[#allocation2 + $0x160] sm:$0xff]
    %v295 = vld [vmem:[#allocation2 + $0x168] sm:$0xff]
    %v296 = vld [vmem:[#allocation2 + $0x170] sm:$0xff]
    %v297 = vld [vmem:[#allocation2 + $0x178] sm:$0xff]
    %v298 = vld [vmem:[#allocation2 + $0x180] sm:$0xff]
    %v299 = vld [vmem:[#allocation2 + $0x188] sm:$0xff]
    %v300 = vld [vmem:[#allocation2 + $0x190] sm:$0xff]
    %v301 = vld [vmem:[#allocation2 + $0x198] sm:$0xff]
    %v302 = vld [vmem:[#allocation2 + $0x1a0] sm:$0xff]
    %v303 = vld [vmem:[#allocation2 + $0x1a8] sm:$0xff]
    %v304 = vld [vmem:[#allocation2 + $0x1b0] sm:$0xff]
    %v305 = vld [vmem:[#allocation2 + $0x1b8] sm:$0xff]
    %v306 = vld [vmem:[#allocation2 + $0x1c0] sm:$0xff]
    %v307 = vld [vmem:[#allocation2 + $0x1c8] sm:$0xff]
    %v308 = vld [vmem:[#allocation2 + $0x1d0] sm:$0xff]
    %v309 = vld [vmem:[#allocation2 + $0x1d8] sm:$0xff]
    %v310 = vld [vmem:[#allocation2 + $0x1e0] sm:$0xff]
    %v311 = vld [vmem:[#allocation2 + $0x1e8] sm:$0xff]
    %v312 = vld [vmem:[#allocation2 + $0x1f0] sm:$0xff]
    %v313 = vld [vmem:[#allocation2 + $0x1f8] sm:$0xff]
    %v314 = vld [vmem:[%s3] sm:$0xf]
    %v316 = vlaneseq
    %v317 = vshrl.u32 %v316, 7
    %v318 = vsub.s32 0, %v317
    %v319 = vrot.slane %v314, %v318
    %v320 = vlaneseq
    %v321 = vshrl.u32 %v320, 7
    %v322 = vsub.s32 1, %v321
    %v323 = vrot.slane %v314, %v322
    %v324 = vlaneseq
    %v325 = vshrl.u32 %v324, 7
    %v326 = vsub.s32 2, %v325
    %v327 = vrot.slane %v314, %v326
    %v328 = vlaneseq
    %v329 = vshrl.u32 %v328, 7
    %v330 = vsub.s32 3, %v329
    %v331 = vrot.slane %v314, %v330
    %v400 = vunpack.c.l.b16 %v250
    %v401 = vunpack.c.h.b16 %v250
    %v402 = vunpack.c.l.b16 %v251
    %v403 = vunpack.c.h.b16 %v251
    %v404 = vunpack.c.l.b16 %v252
    %v405 = vunpack.c.h.b16 %v252
    %v406 = vunpack.c.l.b16 %v253
    %v407 = vunpack.c.h.b16 %v253
    %v408 = vunpack.c.l.b16 %v254
    %v409 = vunpack.c.h.b16 %v254
    %v410 = vunpack.c.l.b16 %v255
    %v411 = vunpack.c.h.b16 %v255
    %v412 = vunpack.c.l.b16 %v256
    %v413 = vunpack.c.h.b16 %v256
    %v414 = vunpack.c.l.b16 %v257
    %v415 = vunpack.c.h.b16 %v257
    %v416 = vunpack.c.l.b16 %v258
    %v417 = vunpack.c.h.b16 %v258
    %v418 = vunpack.c.l.b16 %v259
    %v419 = vunpack.c.h.b16 %v259
    %v420 = vunpack.c.l.b16 %v260
    %v421 = vunpack.c.h.b16 %v260
    %v422 = vunpack.c.l.b16 %v261
    %v423 = vunpack.c.h.b16 %v261
    %v424 = vunpack.c.l.b16 %v262
    %v425 = vunpack.c.h.b16 %v262
    %v426 = vunpack.c.l.b16 %v263
    %v427 = vunpack.c.h.b16 %v263
    %v428 = vunpack.c.l.b16 %v264
    %v429 = vunpack.c.h.b16 %v264
    %v430 = vunpack.c.l.b16 %v265
    %v431 = vunpack.c.h.b16 %v265
    %v432 = vunpack.c.l.b16 %v266
    %v433 = vunpack.c.h.b16 %v266
    %v434 = vunpack.c.l.b16 %v267
    %v435 = vunpack.c.h.b16 %v267
    %v436 = vunpack.c.l.b16 %v268
    %v437 = vunpack.c.h.b16 %v268
    %v438 = vunpack.c.l.b16 %v269
    %v439 = vunpack.c.h.b16 %v269
    %v440 = vunpack.c.l.b16 %v270
    %v441 = vunpack.c.h.b16 %v270
    %v442 = vunpack.c.l.b16 %v271
    %v443 = vunpack.c.h.b16 %v271
    %v444 = vunpack.c.l.b16 %v272
    %v445 = vunpack.c.h.b16 %v272
    %v446 = vunpack.c.l.b16 %v273
    %v447 = vunpack.c.h.b16 %v273
    %v448 = vunpack.c.l.b16 %v274
    %v449 = vunpack.c.h.b16 %v274
    %v450 = vunpack.c.l.b16 %v275
    %v451 = vunpack.c.h.b16 %v275
    %v452 = vunpack.c.l.b16 %v276
    %v453 = vunpack.c.h.b16 %v276
    %v454 = vunpack.c.l.b16 %v277
    %v455 = vunpack.c.h.b16 %v277
    %v456 = vunpack.c.l.b16 %v278
    %v457 = vunpack.c.h.b16 %v278
    %v458 = vunpack.c.l.b16 %v279
    %v459 = vunpack.c.h.b16 %v279
    %v460 = vunpack.c.l.b16 %v280
    %v461 = vunpack.c.h.b16 %v280
    %v462 = vunpack.c.l.b16 %v281
    %v463 = vunpack.c.h.b16 %v281
    %v464 = vunpack.c.l.b16 %v282
    %v465 = vunpack.c.h.b16 %v282
    %v466 = vunpack.c.l.b16 %v283
    %v467 = vunpack.c.h.b16 %v283
    %v468 = vunpack.c.l.b16 %v284
    %v469 = vunpack.c.h.b16 %v284
    %v470 = vunpack.c.l.b16 %v285
    %v471 = vunpack.c.h.b16 %v285
    %v472 = vunpack.c.l.b16 %v286
    %v473 = vunpack.c.h.b16 %v286
    %v474 = vunpack.c.l.b16 %v287
    %v475 = vunpack.c.h.b16 %v287
    %v476 = vunpack.c.l.b16 %v288
    %v477 = vunpack.c.h.b16 %v288
    %v478 = vunpack.c.l.b16 %v289
    %v479 = vunpack.c.h.b16 %v289
    %v480 = vunpack.c.l.b16 %v290
    %v481 = vunpack.c.h.b16 %v290
    %v482 = vunpack.c.l.b16 %v291
    %v483 = vunpack.c.h.b16 %v291
    %v484 = vunpack.c.l.b16 %v292
    %v485 = vunpack.c.h.b16 %v292
    %v486 = vunpack.c.l.b16 %v293
    %v487 = vunpack.c.h.b16 %v293
    %v488 = vunpack.c.l.b16 %v294
    %v489 = vunpack.c.h.b16 %v294
    %v490 = vunpack.c.l.b16 %v295
    %v491 = vunpack.c.h.b16 %v295
    %v492 = vunpack.c.l.b16 %v296
    %v493 = vunpack.c.h.b16 %v296
    %v494 = vunpack.c.l.b16 %v297
    %v495 = vunpack.c.h.b16 %v297
    %v496 = vunpack.c.l.b16 %v298
    %v497 = vunpack.c.h.b16 %v298
    %v498 = vunpack.c.l.b16 %v299
    %v499 = vunpack.c.h.b16 %v299
    %v500 = vunpack.c.l.b16 %v300
    %v501 = vunpack.c.h.b16 %v300
    %v502 = vunpack.c.l.b16 %v301
    %v503 = vunpack.c.h.b16 %v301
    %v504 = vunpack.c.l.b16 %v302
    %v505 = vunpack.c.h.b16 %v302
    %v506 = vunpack.c.l.b16 %v303
    %v507 = vunpack.c.h.b16 %v303
    %v508 = vunpack.c.l.b16 %v304
    %v509 = vunpack.c.h.b16 %v304
    %v510 = vunpack.c.l.b16 %v305
    %v511 = vunpack.c.h.b16 %v305
    %v512 = vunpack.c.l.b16 %v306
    %v513 = vunpack.c.h.b16 %v306
    %v514 = vunpack.c.l.b16 %v307
    %v515 = vunpack.c.h.b16 %v307
    %v516 = vunpack.c.l.b16 %v308
    %v517 = vunpack.c.h.b16 %v308
    %v518 = vunpack.c.l.b16 %v309
    %v519 = vunpack.c.h.b16 %v309
    %v520 = vunpack.c.l.b16 %v310
    %v521 = vunpack.c.h.b16 %v310
    %v522 = vunpack.c.l.b16 %v311
    %v523 = vunpack.c.h.b16 %v311
    %v524 = vunpack.c.l.b16 %v312
    %v525 = vunpack.c.h.b16 %v312
    %v526 = vunpack.c.l.b16 %v313
    %v527 = vunpack.c.h.b16 %v313
    %v528 = vpack.c.b16 %v404, %v400
    %v529 = vpack.c.b16 %v405, %v401
    %v530 = vpack.c.b16 %v406, %v402
    %v531 = vpack.c.b16 %v407, %v403
    %v532 = vpack.c.b16 %v412, %v408
    %v533 = vpack.c.b16 %v413, %v409
    %v534 = vpack.c.b16 %v414, %v410
    %v535 = vpack.c.b16 %v415, %v411
    %v536 = vpack.c.b16 %v420, %v416
    %v537 = vpack.c.b16 %v421, %v417
    %v538 = vpack.c.b16 %v422, %v418
    %v539 = vpack.c.b16 %v423, %v419
    %v540 = vpack.c.b16 %v428, %v424
    %v541 = vpack.c.b16 %v429, %v425
    %v542 = vpack.c.b16 %v430, %v426
    %v543 = vpack.c.b16 %v431, %v427
    %v544 = vpack.c.b16 %v436, %v432
    %v545 = vpack.c.b16 %v437, %v433
    %v546 = vpack.c.b16 %v438, %v434
    %v547 = vpack.c.b16 %v439, %v435
    %v548 = vpack.c.b16 %v444, %v440
    %v549 = vpack.c.b16 %v445, %v441
    %v550 = vpack.c.b16 %v446, %v442
    %v551 = vpack.c.b16 %v447, %v443
    %v552 = vpack.c.b16 %v452, %v448
    %v553 = vpack.c.b16 %v453, %v449
    %v554 = vpack.c.b16 %v454, %v450
    %v555 = vpack.c.b16 %v455, %v451
    %v556 = vpack.c.b16 %v460, %v456
    %v557 = vpack.c.b16 %v461, %v457
    %v558 = vpack.c.b16 %v462, %v458
    %v559 = vpack.c.b16 %v463, %v459
    %v560 = vpack.c.b16 %v468, %v464
    %v561 = vpack.c.b16 %v469, %v465
    %v562 = vpack.c.b16 %v470, %v466
    %v563 = vpack.c.b16 %v471, %v467
    %v564 = vpack.c.b16 %v476, %v472
    %v565 = vpack.c.b16 %v477, %v473
    %v566 = vpack.c.b16 %v478, %v474
    %v567 = vpack.c.b16 %v479, %v475
    %v568 = vpack.c.b16 %v484, %v480
    %v569 = vpack.c.b16 %v485, %v481
    %v570 = vpack.c.b16 %v486, %v482
    %v571 = vpack.c.b16 %v487, %v483
    %v572 = vpack.c.b16 %v492, %v488
    %v573 = vpack.c.b16 %v493, %v489
    %v574 = vpack.c.b16 %v494, %v490
    %v575 = vpack.c.b16 %v495, %v491
    %v576 = vpack.c.b16 %v500, %v496
    %v577 = vpack.c.b16 %v501, %v497
    %v578 = vpack.c.b16 %v502, %v498
    %v579 = vpack.c.b16 %v503, %v499
    %v580 = vpack.c.b16 %v508, %v504
    %v581 = vpack.c.b16 %v509, %v505
    %v582 = vpack.c.b16 %v510, %v506
    %v583 = vpack.c.b16 %v511, %v507
    %v584 = vpack.c.b16 %v516, %v512
    %v585 = vpack.c.b16 %v517, %v513
    %v586 = vpack.c.b16 %v518, %v514
    %v587 = vpack.c.b16 %v519, %v515
    %v588 = vpack.c.b16 %v524, %v520
    %v589 = vpack.c.b16 %v525, %v521
    %v590 = vpack.c.b16 %v526, %v522
    %v591 = vpack.c.b16 %v527, %v523
    %656 = vmatprep.subr.bf16.mxu0 %v529
    %657 = vmatpush1.bf16.msra.mxu0 %v528
    %658 = vmatprep.subr.bf16.mxu0 %v533
    %659 = vmatpush1.bf16.msra.mxu0 %v532
    %660 = vmatprep.subr.bf16.mxu0 %v537
    %661 = vmatpush1.bf16.msra.mxu0 %v536
    %662 = vmatprep.subr.bf16.mxu0 %v541
    %663 = vmatpush1.bf16.msra.mxu0 %v540
    %664 = vmatprep.subr.bf16.mxu0 %v545
    %665 = vmatpush1.bf16.msra.mxu0 %v544
    %666 = vmatprep.subr.bf16.mxu0 %v549
    %667 = vmatpush1.bf16.msra.mxu0 %v548
    %668 = vmatprep.subr.bf16.mxu0 %v553
    %669 = vmatpush1.bf16.msra.mxu0 %v552
    %670 = vmatprep.subr.bf16.mxu0 %v557
    %671 = vmatpush1.bf16.msra.mxu0 %v556
    %672 = vmatprep.subr.bf16.mxu0 %v561
    %673 = vmatpush1.bf16.msra.mxu0 %v560
    %674 = vmatprep.subr.bf16.mxu0 %v565
    %675 = vmatpush1.bf16.msra.mxu0 %v564
    %676 = vmatprep.subr.bf16.mxu0 %v569
    %677 = vmatpush1.bf16.msra.mxu0 %v568
    %678 = vmatprep.subr.bf16.mxu0 %v573
    %679 = vmatpush1.bf16.msra.mxu0 %v572
    %680 = vmatprep.subr.bf16.mxu0 %v577
    %681 = vmatpush1.bf16.msra.mxu0 %v576
    %682 = vmatprep.subr.bf16.mxu0 %v581
    %683 = vmatpush1.bf16.msra.mxu0 %v580
    %684 = vmatprep.subr.bf16.mxu0 %v585
    %685 = vmatpush1.bf16.msra.mxu0 %v584
    %686 = vmatprep.subr.bf16.mxu0 %v589
    %687 = vmatpush1.bf16.msra.mxu0 %v588
    %688 = vmatprep.mubr.bf16.mxu0 %v249
    %689 = vmatmul.mubr.bf16.gmra.mrb[0].mxu0 %v248
    %v690 = vpop.f32.mrb[0].mxu0
    %v691 = vadd.f32 %v319, %v690
    %v692 = vpop.f32.mrb[0].mxu0
    %v693 = vadd.f32 %v323, %v692
    %v694 = vpop.f32.mrb[0].mxu0
    %v695 = vpop.f32.mrb[0].mxu0
    %696 = vdwg.mxu0
    %697 = vmatprep.subr.bf16.mxu0 %v531
    %698 = vmatpush1.bf16.msra.mxu0 %v530
    %699 = vmatprep.subr.bf16.mxu0 %v535
    %700 = vmatpush1.bf16.msra.mxu0 %v534
    %701 = vmatprep.subr.bf16.mxu0 %v539
    %702 = vmatpush1.bf16.msra.mxu0 %v538
    %703 = vmatprep.subr.bf16.mxu0 %v543
    %704 = vmatpush1.bf16.msra.mxu0 %v542
    %705 = vmatprep.subr.bf16.mxu0 %v547
    %706 = vmatpush1.bf16.msra.mxu0 %v546
    %707 = vmatprep.subr.bf16.mxu0 %v551
    %708 = vmatpush1.bf16.msra.mxu0 %v550
    %709 = vmatprep.subr.bf16.mxu0 %v555
    %710 = vmatpush1.bf16.msra.mxu0 %v554
    %711 = vmatprep.subr.bf16.mxu0 %v559
    %712 = vmatpush1.bf16.msra.mxu0 %v558
    %713 = vmatprep.subr.bf16.mxu0 %v563
    %714 = vmatpush1.bf16.msra.mxu0 %v562
    %715 = vmatprep.subr.bf16.mxu0 %v567
    %716 = vmatpush1.bf16.msra.mxu0 %v566
    %717 = vmatprep.subr.bf16.mxu0 %v571
    %718 = vmatpush1.bf16.msra.mxu0 %v570
    %719 = vmatprep.subr.bf16.mxu0 %v575
    %720 = vmatpush1.bf16.msra.mxu0 %v574
    %721 = vmatprep.subr.bf16.mxu0 %v579
    %722 = vmatpush1.bf16.msra.mxu0 %v578
    %723 = vmatprep.subr.bf16.mxu0 %v583
    %724 = vmatpush1.bf16.msra.mxu0 %v582
    %725 = vmatprep.subr.bf16.mxu0 %v587
    %726 = vmatpush1.bf16.msra.mxu0 %v586
    %727 = vmatprep.subr.bf16.mxu0 %v591
    %728 = vmatpush1.bf16.msra.mxu0 %v590
    %729 = vmatprep.mubr.bf16.mxu0 %v249
    %730 = vmatmul.mubr.bf16.gmra.mrb[0].mxu0 %v248
    %v731 = vpop.f32.mrb[0].mxu0
    %v732 = vadd.f32 %v327, %v731
    %v733 = vpop.f32.mrb[0].mxu0
    %v734 = vadd.f32 %v331, %v733
    %v735 = vpop.f32.mrb[0].mxu0
    %v736 = vpop.f32.mrb[0].mxu0
    %737 = vdwg.mxu0
    %v738 = vpack.c.bf16 %v691, %v691
    %v739 = vpack.c.bf16 %v693, %v693
    %v740 = vpack.c.bf16 %v732, %v732
    %v741 = vpack.c.bf16 %v734, %v734
    %v742 = vld [vmem:[#allocation5] sm:$0xff]
    %v743 = vld [vmem:[#allocation5 + $0x8] sm:$0xff]
    %v744 = vld [vmem:[#allocation5 + $0x10] sm:$0xff]
    %v745 = vld [vmem:[#allocation5 + $0x18] sm:$0xff]
    %v746 = vld [vmem:[#allocation5 + $0x20] sm:$0xff]
    %v747 = vld [vmem:[#allocation5 + $0x28] sm:$0xff]
    %v748 = vld [vmem:[#allocation5 + $0x30] sm:$0xff]
    %v749 = vld [vmem:[#allocation5 + $0x38] sm:$0xff]
    %v750 = vld [vmem:[#allocation5 + $0x40] sm:$0xff]
    %v751 = vld [vmem:[#allocation5 + $0x48] sm:$0xff]
    %v752 = vld [vmem:[#allocation5 + $0x50] sm:$0xff]
    %v753 = vld [vmem:[#allocation5 + $0x58] sm:$0xff]
    %v754 = vld [vmem:[#allocation5 + $0x60] sm:$0xff]
    %v755 = vld [vmem:[#allocation5 + $0x68] sm:$0xff]
    %v756 = vld [vmem:[#allocation5 + $0x70] sm:$0xff]
    %v757 = vld [vmem:[#allocation5 + $0x78] sm:$0xff]
    %v758 = vld [vmem:[#allocation5 + $0x80] sm:$0xff]
    %v759 = vld [vmem:[#allocation5 + $0x88] sm:$0xff]
    %v760 = vld [vmem:[#allocation5 + $0x90] sm:$0xff]
    %v761 = vld [vmem:[#allocation5 + $0x98] sm:$0xff]
    %v762 = vld [vmem:[#allocation5 + $0xa0] sm:$0xff]
    %v763 = vld [vmem:[#allocation5 + $0xa8] sm:$0xff]
    %v764 = vld [vmem:[#allocation5 + $0xb0] sm:$0xff]
    %v765 = vld [vmem:[#allocation5 + $0xb8] sm:$0xff]
    %v766 = vld [vmem:[#allocation5 + $0xc0] sm:$0xff]
    %v767 = vld [vmem:[#allocation5 + $0xc8] sm:$0xff]
    %v768 = vld [vmem:[#allocation5 + $0xd0] sm:$0xff]
    %v769 = vld [vmem:[#allocation5 + $0xd8] sm:$0xff]
    %v770 = vld [vmem:[#allocation5 + $0xe0] sm:$0xff]
    %v771 = vld [vmem:[#allocation5 + $0xe8] sm:$0xff]
    %v772 = vld [vmem:[#allocation5 + $0xf0] sm:$0xff]
    %v773 = vld [vmem:[#allocation5 + $0xf8] sm:$0xff]
    %v774 = vld [vmem:[#allocation5 + $0x100] sm:$0xff]
    %v775 = vld [vmem:[#allocation5 + $0x108] sm:$0xff]
    %v776 = vld [vmem:[#allocation5 + $0x110] sm:$0xff]
    %v777 = vld [vmem:[#allocation5 + $0x118] sm:$0xff]
    %v778 = vld [vmem:[#allocation5 + $0x120] sm:$0xff]
    %v779 = vld [vmem:[#allocation5 + $0x128] sm:$0xff]
    %v780 = vld [vmem:[#allocation5 + $0x130] sm:$0xff]
    %v781 = vld [vmem:[#allocation5 + $0x138] sm:$0xff]
    %v782 = vld [vmem:[#allocation5 + $0x140] sm:$0xff]
    %v783 = vld [vmem:[#allocation5 + $0x148] sm:$0xff]
    %v784 = vld [vmem:[#allocation5 + $0x150] sm:$0xff]
    %v785 = vld [vmem:[#allocation5 + $0x158] sm:$0xff]
    %v786 = vld [vmem:[#allocation5 + $0x160] sm:$0xff]
    %v787 = vld [vmem:[#allocation5 + $0x168] sm:$0xff]
    %v788 = vld [vmem:[#allocation5 + $0x170] sm:$0xff]
    %v789 = vld [vmem:[#allocation5 + $0x178] sm:$0xff]
    %v790 = vld [vmem:[#allocation5 + $0x180] sm:$0xff]
    %v791 = vld [vmem:[#allocation5 + $0x188] sm:$0xff]
    %v792 = vld [vmem:[#allocation5 + $0x190] sm:$0xff]
    %v793 = vld [vmem:[#allocation5 + $0x198] sm:$0xff]
    %v794 = vld [vmem:[#allocation5 + $0x1a0] sm:$0xff]
    %v795 = vld [vmem:[#allocation5 + $0x1a8] sm:$0xff]
    %v796 = vld [vmem:[#allocation5 + $0x1b0] sm:$0xff]
    %v797 = vld [vmem:[#allocation5 + $0x1b8] sm:$0xff]
    %v798 = vld [vmem:[#allocation5 + $0x1c0] sm:$0xff]
    %v799 = vld [vmem:[#allocation5 + $0x1c8] sm:$0xff]
    %v800 = vld [vmem:[#allocation5 + $0x1d0] sm:$0xff]
    %v801 = vld [vmem:[#allocation5 + $0x1d8] sm:$0xff]
    %v802 = vld [vmem:[#allocation5 + $0x1e0] sm:$0xff]
    %v803 = vld [vmem:[#allocation5 + $0x1e8] sm:$0xff]
    %v804 = vld [vmem:[#allocation5 + $0x1f0] sm:$0xff]
    %v805 = vld [vmem:[#allocation5 + $0x1f8] sm:$0xff]
    %v806 = vld [vmem:[#allocation7] sm:$0x3]
    %v808 = vlaneseq
    %v809 = vshrl.u32 %v808, 7
    %v810 = vsub.s32 0, %v809
    %v811 = vrot.slane %v806, %v810
    %v812 = vlaneseq
    %v813 = vshrl.u32 %v812, 7
    %v814 = vsub.s32 1, %v813
    %v815 = vrot.slane %v806, %v814
    %v882 = vunpack.c.l.b16 %v742
    %v883 = vunpack.c.h.b16 %v742
    %v884 = vunpack.c.l.b16 %v743
    %v885 = vunpack.c.h.b16 %v743
    %v886 = vunpack.c.l.b16 %v744
    %v887 = vunpack.c.h.b16 %v744
    %v888 = vunpack.c.l.b16 %v745
    %v889 = vunpack.c.h.b16 %v745
    %v890 = vunpack.c.l.b16 %v746
    %v891 = vunpack.c.h.b16 %v746
    %v892 = vunpack.c.l.b16 %v747
    %v893 = vunpack.c.h.b16 %v747
    %v894 = vunpack.c.l.b16 %v748
    %v895 = vunpack.c.h.b16 %v748
    %v896 = vunpack.c.l.b16 %v749
    %v897 = vunpack.c.h.b16 %v749
    %v898 = vunpack.c.l.b16 %v750
    %v899 = vunpack.c.h.b16 %v750
    %v900 = vunpack.c.l.b16 %v751
    %v901 = vunpack.c.h.b16 %v751
    %v902 = vunpack.c.l.b16 %v752
    %v903 = vunpack.c.h.b16 %v752
    %v904 = vunpack.c.l.b16 %v753
    %v905 = vunpack.c.h.b16 %v753
    %v906 = vunpack.c.l.b16 %v754
    %v907 = vunpack.c.h.b16 %v754
    %v908 = vunpack.c.l.b16 %v755
    %v909 = vunpack.c.h.b16 %v755
    %v910 = vunpack.c.l.b16 %v756
    %v911 = vunpack.c.h.b16 %v756
    %v912 = vunpack.c.l.b16 %v757
    %v913 = vunpack.c.h.b16 %v757
    %v914 = vunpack.c.l.b16 %v758
    %v915 = vunpack.c.h.b16 %v758
    %v916 = vunpack.c.l.b16 %v759
    %v917 = vunpack.c.h.b16 %v759
    %v918 = vunpack.c.l.b16 %v760
    %v919 = vunpack.c.h.b16 %v760
    %v920 = vunpack.c.l.b16 %v761
    %v921 = vunpack.c.h.b16 %v761
    %v922 = vunpack.c.l.b16 %v762
    %v923 = vunpack.c.h.b16 %v762
    %v924 = vunpack.c.l.b16 %v763
    %v925 = vunpack.c.h.b16 %v763
    %v926 = vunpack.c.l.b16 %v764
    %v927 = vunpack.c.h.b16 %v764
    %v928 = vunpack.c.l.b16 %v765
    %v929 = vunpack.c.h.b16 %v765
    %v930 = vunpack.c.l.b16 %v766
    %v931 = vunpack.c.h.b16 %v766
    %v932 = vunpack.c.l.b16 %v767
    %v933 = vunpack.c.h.b16 %v767
    %v934 = vunpack.c.l.b16 %v768
    %v935 = vunpack.c.h.b16 %v768
    %v936 = vunpack.c.l.b16 %v769
    %v937 = vunpack.c.h.b16 %v769
    %v938 = vunpack.c.l.b16 %v770
    %v939 = vunpack.c.h.b16 %v770
    %v940 = vunpack.c.l.b16 %v771
    %v941 = vunpack.c.h.b16 %v771
    %v942 = vunpack.c.l.b16 %v772
    %v943 = vunpack.c.h.b16 %v772
    %v944 = vunpack.c.l.b16 %v773
    %v945 = vunpack.c.h.b16 %v773
    %v946 = vunpack.c.l.b16 %v774
    %v947 = vunpack.c.h.b16 %v774
    %v948 = vunpack.c.l.b16 %v775
    %v949 = vunpack.c.h.b16 %v775
    %v950 = vunpack.c.l.b16 %v776
    %v951 = vunpack.c.h.b16 %v776
    %v952 = vunpack.c.l.b16 %v777
    %v953 = vunpack.c.h.b16 %v777
    %v954 = vunpack.c.l.b16 %v778
    %v955 = vunpack.c.h.b16 %v778
    %v956 = vunpack.c.l.b16 %v779
    %v957 = vunpack.c.h.b16 %v779
    %v958 = vunpack.c.l.b16 %v780
    %v959 = vunpack.c.h.b16 %v780
    %v960 = vunpack.c.l.b16 %v781
    %v961 = vunpack.c.h.b16 %v781
    %v962 = vunpack.c.l.b16 %v782
    %v963 = vunpack.c.h.b16 %v782
    %v964 = vunpack.c.l.b16 %v783
    %v965 = vunpack.c.h.b16 %v783
    %v966 = vunpack.c.l.b16 %v784
    %v967 = vunpack.c.h.b16 %v784
    %v968 = vunpack.c.l.b16 %v785
    %v969 = vunpack.c.h.b16 %v785
    %v970 = vunpack.c.l.b16 %v786
    %v971 = vunpack.c.h.b16 %v786
    %v972 = vunpack.c.l.b16 %v787
    %v973 = vunpack.c.h.b16 %v787
    %v974 = vunpack.c.l.b16 %v788
    %v975 = vunpack.c.h.b16 %v788
    %v976 = vunpack.c.l.b16 %v789
    %v977 = vunpack.c.h.b16 %v789
    %v978 = vunpack.c.l.b16 %v790
    %v979 = vunpack.c.h.b16 %v790
    %v980 = vunpack.c.l.b16 %v791
    %v981 = vunpack.c.h.b16 %v791
    %v982 = vunpack.c.l.b16 %v792
    %v983 = vunpack.c.h.b16 %v792
    %v984 = vunpack.c.l.b16 %v793
    %v985 = vunpack.c.h.b16 %v793
    %v986 = vunpack.c.l.b16 %v794
    %v987 = vunpack.c.h.b16 %v794
    %v988 = vunpack.c.l.b16 %v795
    %v989 = vunpack.c.h.b16 %v795
    %v990 = vunpack.c.l.b16 %v796
    %v991 = vunpack.c.h.b16 %v796
    %v992 = vunpack.c.l.b16 %v797
    %v993 = vunpack.c.h.b16 %v797
    %v994 = vunpack.c.l.b16 %v798
    %v995 = vunpack.c.h.b16 %v798
    %v996 = vunpack.c.l.b16 %v799
    %v997 = vunpack.c.h.b16 %v799
    %v998 = vunpack.c.l.b16 %v800
    %v999 = vunpack.c.h.b16 %v800
    %v1000 = vunpack.c.l.b16 %v801
    %v1001 = vunpack.c.h.b16 %v801
    %v1002 = vunpack.c.l.b16 %v802
    %v1003 = vunpack.c.h.b16 %v802
    %v1004 = vunpack.c.l.b16 %v803
    %v1005 = vunpack.c.h.b16 %v803
    %v1006 = vunpack.c.l.b16 %v804
    %v1007 = vunpack.c.h.b16 %v804
    %v1008 = vunpack.c.l.b16 %v805
    %v1009 = vunpack.c.h.b16 %v805
    %v1010 = vpack.c.b16 %v884, %v882
    %v1011 = vpack.c.b16 %v885, %v883
    %v1012 = vpack.c.b16 %v888, %v886
    %v1013 = vpack.c.b16 %v889, %v887
    %v1014 = vpack.c.b16 %v892, %v890
    %v1015 = vpack.c.b16 %v893, %v891
    %v1016 = vpack.c.b16 %v896, %v894
    %v1017 = vpack.c.b16 %v897, %v895
    %v1018 = vpack.c.b16 %v900, %v898
    %v1019 = vpack.c.b16 %v901, %v899
    %v1020 = vpack.c.b16 %v904, %v902
    %v1021 = vpack.c.b16 %v905, %v903
    %v1022 = vpack.c.b16 %v908, %v906
    %v1023 = vpack.c.b16 %v909, %v907
    %v1024 = vpack.c.b16 %v912, %v910
    %v1025 = vpack.c.b16 %v913, %v911
    %v1026 = vpack.c.b16 %v916, %v914
    %v1027 = vpack.c.b16 %v917, %v915
    %v1028 = vpack.c.b16 %v920, %v918
    %v1029 = vpack.c.b16 %v921, %v919
    %v1030 = vpack.c.b16 %v924, %v922
    %v1031 = vpack.c.b16 %v925, %v923
    %v1032 = vpack.c.b16 %v928, %v926
    %v1033 = vpack.c.b16 %v929, %v927
    %v1034 = vpack.c.b16 %v932, %v930
    %v1035 = vpack.c.b16 %v933, %v931
    %v1036 = vpack.c.b16 %v936, %v934
    %v1037 = vpack.c.b16 %v937, %v935
    %v1038 = vpack.c.b16 %v940, %v938
    %v1039 = vpack.c.b16 %v941, %v939
    %v1040 = vpack.c.b16 %v944, %v942
    %v1041 = vpack.c.b16 %v945, %v943
    %v1042 = vpack.c.b16 %v948, %v946
    %v1043 = vpack.c.b16 %v949, %v947
    %v1044 = vpack.c.b16 %v952, %v950
    %v1045 = vpack.c.b16 %v953, %v951
    %v1046 = vpack.c.b16 %v956, %v954
    %v1047 = vpack.c.b16 %v957, %v955
    %v1048 = vpack.c.b16 %v960, %v958
    %v1049 = vpack.c.b16 %v961, %v959
    %v1050 = vpack.c.b16 %v964, %v962
    %v1051 = vpack.c.b16 %v965, %v963
    %v1052 = vpack.c.b16 %v968, %v966
    %v1053 = vpack.c.b16 %v969, %v967
    %v1054 = vpack.c.b16 %v972, %v970
    %v1055 = vpack.c.b16 %v973, %v971
    %v1056 = vpack.c.b16 %v976, %v974
    %v1057 = vpack.c.b16 %v977, %v975
    %v1058 = vpack.c.b16 %v980, %v978
    %v1059 = vpack.c.b16 %v981, %v979
    %v1060 = vpack.c.b16 %v984, %v982
    %v1061 = vpack.c.b16 %v985, %v983
    %v1062 = vpack.c.b16 %v988, %v986
    %v1063 = vpack.c.b16 %v989, %v987
    %v1064 = vpack.c.b16 %v992, %v990
    %v1065 = vpack.c.b16 %v993, %v991
    %v1066 = vpack.c.b16 %v996, %v994
    %v1067 = vpack.c.b16 %v997, %v995
    %v1068 = vpack.c.b16 %v1000, %v998
    %v1069 = vpack.c.b16 %v1001, %v999
    %v1070 = vpack.c.b16 %v1004, %v1002
    %v1071 = vpack.c.b16 %v1005, %v1003
    %v1072 = vpack.c.b16 %v1008, %v1006
    %v1073 = vpack.c.b16 %v1009, %v1007
    %1138 = vmatprep.subr.bf16.mxu0 %v1011
    %1139 = vmatpush1.bf16.msra.mxu0 %v1010
    %1140 = vmatprep.subr.bf16.mxu0 %v1013
    %1141 = vmatpush1.bf16.msra.mxu0 %v1012
    %1142 = vmatprep.subr.bf16.mxu0 %v1015
    %1143 = vmatpush1.bf16.msra.mxu0 %v1014
    %1144 = vmatprep.subr.bf16.mxu0 %v1017
    %1145 = vmatpush1.bf16.msra.mxu0 %v1016
    %1146 = vmatprep.subr.bf16.mxu0 %v1019
    %1147 = vmatpush1.bf16.msra.mxu0 %v1018
    %1148 = vmatprep.subr.bf16.mxu0 %v1021
    %1149 = vmatpush1.bf16.msra.mxu0 %v1020
    %1150 = vmatprep.subr.bf16.mxu0 %v1023
    %1151 = vmatpush1.bf16.msra.mxu0 %v1022
    %1152 = vmatprep.subr.bf16.mxu0 %v1025
    %1153 = vmatpush1.bf16.msra.mxu0 %v1024
    %1154 = vmatprep.subr.bf16.mxu0 %v1027
    %1155 = vmatpush1.bf16.msra.mxu0 %v1026
    %1156 = vmatprep.subr.bf16.mxu0 %v1029
    %1157 = vmatpush1.bf16.msra.mxu0 %v1028
    %1158 = vmatprep.subr.bf16.mxu0 %v1031
    %1159 = vmatpush1.bf16.msra.mxu0 %v1030
    %1160 = vmatprep.subr.bf16.mxu0 %v1033
    %1161 = vmatpush1.bf16.msra.mxu0 %v1032
    %1162 = vmatprep.subr.bf16.mxu0 %v1035
    %1163 = vmatpush1.bf16.msra.mxu0 %v1034
    %1164 = vmatprep.subr.bf16.mxu0 %v1037
    %1165 = vmatpush1.bf16.msra.mxu0 %v1036
    %1166 = vmatprep.subr.bf16.mxu0 %v1039
    %1167 = vmatpush1.bf16.msra.mxu0 %v1038
    %1168 = vmatprep.subr.bf16.mxu0 %v1041
    %1169 = vmatpush1.bf16.msra.mxu0 %v1040
    %1170 = vmatprep.mubr.bf16.mxu0 %v739
    %1171 = vmatmul.mubr.bf16.gmra.mrb[0].mxu0 %v738
    %v1172 = vpop.f32.mrb[0].mxu0
    %v1173 = vadd.f32 %v811, %v1172
    %v1174 = vpop.f32.mrb[0].mxu0
    %v1175 = vadd.f32 %v815, %v1174
    %v1176 = vpop.f32.mrb[0].mxu0
    %v1177 = vpop.f32.mrb[0].mxu0
    %1178 = vdwg.mxu0
    %1179 = vmatprep.subr.bf16.mxu0 %v1043
    %1180 = vmatpush1.bf16.msra.mxu0 %v1042
    %1181 = vmatprep.subr.bf16.mxu0 %v1045
    %1182 = vmatpush1.bf16.msra.mxu0 %v1044
    %1183 = vmatprep.subr.bf16.mxu0 %v1047
    %1184 = vmatpush1.bf16.msra.mxu0 %v1046
    %1185 = vmatprep.subr.bf16.mxu0 %v1049
    %1186 = vmatpush1.bf16.msra.mxu0 %v1048
    %1187 = vmatprep.subr.bf16.mxu0 %v1051
    %1188 = vmatpush1.bf16.msra.mxu0 %v1050
    %1189 = vmatprep.subr.bf16.mxu0 %v1053
    %1190 = vmatpush1.bf16.msra.mxu0 %v1052
    %1191 = vmatprep.subr.bf16.mxu0 %v1055
    %1192 = vmatpush1.bf16.msra.mxu0 %v1054
    %1193 = vmatprep.subr.bf16.mxu0 %v1057
    %1194 = vmatpush1.bf16.msra.mxu0 %v1056
    %1195 = vmatprep.subr.bf16.mxu0 %v1059
    %1196 = vmatpush1.bf16.msra.mxu0 %v1058
    %1197 = vmatprep.subr.bf16.mxu0 %v1061
    %1198 = vmatpush1.bf16.msra.mxu0 %v1060
    %1199 = vmatprep.subr.bf16.mxu0 %v1063
    %1200 = vmatpush1.bf16.msra.mxu0 %v1062
    %1201 = vmatprep.subr.bf16.mxu0 %v1065
    %1202 = vmatpush1.bf16.msra.mxu0 %v1064
    %1203 = vmatprep.subr.bf16.mxu0 %v1067
    %1204 = vmatpush1.bf16.msra.mxu0 %v1066
    %1205 = vmatprep.subr.bf16.mxu0 %v1069
    %1206 = vmatpush1.bf16.msra.mxu0 %v1068
    %1207 = vmatprep.subr.bf16.mxu0 %v1071
    %1208 = vmatpush1.bf16.msra.mxu0 %v1070
    %1209 = vmatprep.subr.bf16.mxu0 %v1073
    %1210 = vmatpush1.bf16.msra.mxu0 %v1072
    %1211 = vmatprep.mubr.bf16.mxu0 %v741
    %1212 = vmatmul.mubr.bf16.gmra.mrb[0].mxu0 %v740
    %v1213 = vpop.f32.mrb[0].mxu0
    %v1214 = vadd.f32 %v1173, %v1213
    %v1215 = vpop.f32.mrb[0].mxu0
    %v1216 = vadd.f32 %v1175, %v1215
    %v1217 = vpop.f32.mrb[0].mxu0
    %v1218 = vpop.f32.mrb[0].mxu0
    %1219 = vdwg.mxu0
    %v1220 = vpack.c.bf16 %v1214, %v1214
    %v1221 = vpack.c.bf16 %v1216, %v1216
    %v1222 = vld [vmem:[%s6] sm:$0xf]
    %v1223 = vld [vmem:[%s6 + $0x4] sm:$0xf]
    %v1224 = vld [vmem:[%s6 + $0x8] sm:$0xf]
    %v1225 = vld [vmem:[%s6 + $0xc] sm:$0xf]
    %v1226 = vld [vmem:[%s6 + $0x10] sm:$0xf]
    %v1227 = vld [vmem:[%s6 + $0x14] sm:$0xf]
    %v1228 = vld [vmem:[%s6 + $0x18] sm:$0xf]
    %v1229 = vld [vmem:[%s6 + $0x1c] sm:$0xf]
    %v1230 = vld [vmem:[%s6 + $0x20] sm:$0xf]
    %v1231 = vld [vmem:[%s6 + $0x24] sm:$0xf]
    %v1232 = vld [vmem:[%s6 + $0x28] sm:$0xf]
    %v1233 = vld [vmem:[%s6 + $0x2c] sm:$0xf]
    %v1234 = vld [vmem:[%s6 + $0x30] sm:$0xf]
    %v1235 = vld [vmem:[%s6 + $0x34] sm:$0xf]
    %v1236 = vld [vmem:[%s6 + $0x38] sm:$0xf]
    %v1237 = vld [vmem:[%s6 + $0x3c] sm:$0xf]
    %v1238 = vld [vmem:[%s6 + $0x40] sm:$0xf]
    %v1239 = vld [vmem:[%s6 + $0x44] sm:$0xf]
    %v1240 = vld [vmem:[%s6 + $0x48] sm:$0xf]
    %v1241 = vld [vmem:[%s6 + $0x4c] sm:$0xf]
    %v1242 = vld [vmem:[%s6 + $0x50] sm:$0xf]
    %v1243 = vld [vmem:[%s6 + $0x54] sm:$0xf]
    %v1244 = vld [vmem:[%s6 + $0x58] sm:$0xf]
    %v1245 = vld [vmem:[%s6 + $0x5c] sm:$0xf]
    %v1246 = vld [vmem:[%s6 + $0x60] sm:$0xf]
    %v1247 = vld [vmem:[%s6 + $0x64] sm:$0xf]
    %v1248 = vld [vmem:[%s6 + $0x68] sm:$0xf]
    %v1249 = vld [vmem:[%s6 + $0x6c] sm:$0xf]
    %v1250 = vld [vmem:[%s6 + $0x70] sm:$0xf]
    %v1251 = vld [vmem:[%s6 + $0x74] sm:$0xf]
    %v1252 = vld [vmem:[%s6 + $0x78] sm:$0xf]
    %v1253 = vld [vmem:[%s6 + $0x7c] sm:$0xf]
    %v1254 = vld [vmem:[#allocation8] sm:$0x1]
    %v1256 = vlaneseq
    %v1257 = vshrl.u32 %v1256, 7
    %v1258 = vsub.s32 0, %v1257
    %v1259 = vrot.slane %v1254, %v1258
    %v1293 = vunpack.c.l.b16 %v1222
    %v1294 = vunpack.c.l.b16 %v1223
    %v1295 = vunpack.c.l.b16 %v1224
    %v1296 = vunpack.c.l.b16 %v1225
    %v1297 = vunpack.c.l.b16 %v1226
    %v1298 = vunpack.c.l.b16 %v1227
    %v1299 = vunpack.c.l.b16 %v1228
    %v1300 = vunpack.c.l.b16 %v1229
    %v1301 = vunpack.c.l.b16 %v1230
    %v1302 = vunpack.c.l.b16 %v1231
    %v1303 = vunpack.c.l.b16 %v1232
    %v1304 = vunpack.c.l.b16 %v1233
    %v1305 = vunpack.c.l.b16 %v1234
    %v1306 = vunpack.c.l.b16 %v1235
    %v1307 = vunpack.c.l.b16 %v1236
    %v1308 = vunpack.c.l.b16 %v1237
    %v1309 = vunpack.c.l.b16 %v1238
    %v1310 = vunpack.c.l.b16 %v1239
    %v1311 = vunpack.c.l.b16 %v1240
    %v1312 = vunpack.c.l.b16 %v1241
    %v1313 = vunpack.c.l.b16 %v1242
    %v1314 = vunpack.c.l.b16 %v1243
    %v1315 = vunpack.c.l.b16 %v1244
    %v1316 = vunpack.c.l.b16 %v1245
    %v1317 = vunpack.c.l.b16 %v1246
    %v1318 = vunpack.c.l.b16 %v1247
    %v1319 = vunpack.c.l.b16 %v1248
    %v1320 = vunpack.c.l.b16 %v1249
    %v1321 = vunpack.c.l.b16 %v1250
    %v1322 = vunpack.c.l.b16 %v1251
    %v1323 = vunpack.c.l.b16 %v1252
    %v1324 = vunpack.c.l.b16 %v1253
    %v1325 = vpack.c.b16 %v1294, %v1293
    %v1326 = vpack.c.b16 %v1296, %v1295
    %v1327 = vpack.c.b16 %v1298, %v1297
    %v1328 = vpack.c.b16 %v1300, %v1299
    %v1329 = vpack.c.b16 %v1302, %v1301
    %v1330 = vpack.c.b16 %v1304, %v1303
    %v1331 = vpack.c.b16 %v1306, %v1305
    %v1332 = vpack.c.b16 %v1308, %v1307
    %v1333 = vpack.c.b16 %v1310, %v1309
    %v1334 = vpack.c.b16 %v1312, %v1311
    %v1335 = vpack.c.b16 %v1314, %v1313
    %v1336 = vpack.c.b16 %v1316, %v1315
    %v1337 = vpack.c.b16 %v1318, %v1317
    %v1338 = vpack.c.b16 %v1320, %v1319
    %v1339 = vpack.c.b16 %v1322, %v1321
    %v1340 = vpack.c.b16 %v1324, %v1323
    %1357 = vmatprep.subr.bf16.mxu0 0
    %1358 = vmatpush1.bf16.msra.mxu0 %v1325
    %1359 = vmatprep.subr.bf16.mxu0 0
    %1360 = vmatpush1.bf16.msra.mxu0 %v1326
    %1361 = vmatprep.subr.bf16.mxu0 0
    %1362 = vmatpush1.bf16.msra.mxu0 %v1327
    %1363 = vmatprep.subr.bf16.mxu0 0
    %1364 = vmatpush1.bf16.msra.mxu0 %v1328
    %1365 = vmatprep.subr.bf16.mxu0 0
    %1366 = vmatpush1.bf16.msra.mxu0 %v1329
    %1367 = vmatprep.subr.bf16.mxu0 0
    %1368 = vmatpush1.bf16.msra.mxu0 %v1330
    %1369 = vmatprep.subr.bf16.mxu0 0
    %1370 = vmatpush1.bf16.msra.mxu0 %v1331
    %1371 = vmatprep.subr.bf16.mxu0 0
    %1372 = vmatpush1.bf16.msra.mxu0 %v1332
    %1373 = vmatprep.subr.bf16.mxu0 0
    %1374 = vmatpush1.bf16.msra.mxu0 %v1333
    %1375 = vmatprep.subr.bf16.mxu0 0
    %1376 = vmatpush1.bf16.msra.mxu0 %v1334
    %1377 = vmatprep.subr.bf16.mxu0 0
    %1378 = vmatpush1.bf16.msra.mxu0 %v1335
    %1379 = vmatprep.subr.bf16.mxu0 0
    %1380 = vmatpush1.bf16.msra.mxu0 %v1336
    %1381 = vmatprep.subr.bf16.mxu0 0
    %1382 = vmatpush1.bf16.msra.mxu0 %v1337
    %1383 = vmatprep.subr.bf16.mxu0 0
    %1384 = vmatpush1.bf16.msra.mxu0 %v1338
    %1385 = vmatprep.subr.bf16.mxu0 0
    %1386 = vmatpush1.bf16.msra.mxu0 %v1339
    %1387 = vmatprep.subr.bf16.mxu0 0
    %1388 = vmatpush1.bf16.msra.mxu0 %v1340
    %1389 = vmatprep.mubr.bf16.mxu0 %v1221
    %1390 = vmatmul.mubr.bf16.gmra.mrb[0].mxu0 %v1220
    %v1391 = vpop.f32.mrb[0].mxu0
    %v1392 = vadd.f32 %v1259, %v1391
    %v1393 = vpop.f32.mrb[0].mxu0
    %v1394 = vpop.f32.mrb[0].mxu0
    %v1395 = vpop.f32.mrb[0].mxu0
    %1396 = vdwg.mxu0
    %v1397 = vpack.c.bf16 %v1392, %v1392
    %v1398 = vld [vmem:[%s8] sm:$0xf]
    %v1399 = vld [vmem:[%s8 + $0x4] sm:$0xf]
    %v1400 = vld [vmem:[%s8 + $0x8] sm:$0xf]
    %v1401 = vld [vmem:[%s8 + $0xc] sm:$0xf]
    %v1402 = vld [vmem:[%s8 + $0x10] sm:$0xf]
    %v1403 = vld [vmem:[%s8 + $0x14] sm:$0xf]
    %v1404 = vld [vmem:[%s8 + $0x18] sm:$0xf]
    %v1405 = vld [vmem:[%s8 + $0x1c] sm:$0xf]
    %v1406 = vld [vmem:[%s8 + $0x20] sm:$0xf]
    %v1407 = vld [vmem:[%s8 + $0x24] sm:$0xf]
    %v1408 = vld [vmem:[%s8 + $0x28] sm:$0xf]
    %v1409 = vld [vmem:[%s8 + $0x2c] sm:$0xf]
    %v1410 = vld [vmem:[%s8 + $0x30] sm:$0xf]
    %v1411 = vld [vmem:[%s8 + $0x34] sm:$0xf]
    %v1412 = vld [vmem:[%s8 + $0x38] sm:$0xf]
    %v1413 = vld [vmem:[%s8 + $0x3c] sm:$0xf]
    %v1414 = vld [vmem:[#allocation10] sm:$0x1]
    %v1416 = vlaneseq
    %v1417 = vshrl.u32 %v1416, 7
    %v1418 = vsub.s32 0, %v1417
    %v1419 = vrot.slane %v1414, %v1418
    %v1437 = vunpack.c.l.b16 %v1398
    %v1438 = vunpack.c.l.b16 %v1399
    %v1439 = vunpack.c.l.b16 %v1400
    %v1440 = vunpack.c.l.b16 %v1401
    %v1441 = vunpack.c.l.b16 %v1402
    %v1442 = vunpack.c.l.b16 %v1403
    %v1443 = vunpack.c.l.b16 %v1404
    %v1444 = vunpack.c.l.b16 %v1405
    %v1445 = vunpack.c.l.b16 %v1406
    %v1446 = vunpack.c.l.b16 %v1407
    %v1447 = vunpack.c.l.b16 %v1408
    %v1448 = vunpack.c.l.b16 %v1409
    %v1449 = vunpack.c.l.b16 %v1410
    %v1450 = vunpack.c.l.b16 %v1411
    %v1451 = vunpack.c.l.b16 %v1412
    %v1452 = vunpack.c.l.b16 %v1413
    %v1453 = vpack.c.b16 %v1438, %v1437
    %v1454 = vpack.c.b16 %v1440, %v1439
    %v1455 = vpack.c.b16 %v1442, %v1441
    %v1456 = vpack.c.b16 %v1444, %v1443
    %v1457 = vpack.c.b16 %v1446, %v1445
    %v1458 = vpack.c.b16 %v1448, %v1447
    %v1459 = vpack.c.b16 %v1450, %v1449
    %v1460 = vpack.c.b16 %v1452, %v1451
    %1469 = vmatprep.subr.bf16.mxu0 0
    %1470 = vmatpush1.bf16.msra.mxu0 %v1453
    %1471 = vmatprep.subr.bf16.mxu0 0
    %1472 = vmatpush1.bf16.msra.mxu0 %v1454
    %1473 = vmatprep.subr.bf16.mxu0 0
    %1474 = vmatpush1.bf16.msra.mxu0 %v1455
    %1475 = vmatprep.subr.bf16.mxu0 0
    %1476 = vmatpush1.bf16.msra.mxu0 %v1456
    %1477 = vmatprep.subr.bf16.mxu0 0
    %1478 = vmatpush1.bf16.msra.mxu0 %v1457
    %1479 = vmatprep.subr.bf16.mxu0 0
    %1480 = vmatpush1.bf16.msra.mxu0 %v1458
    %1481 = vmatprep.subr.bf16.mxu0 0
    %1482 = vmatpush1.bf16.msra.mxu0 %v1459
    %1483 = vmatprep.subr.bf16.mxu0 0
    %1484 = vmatpush1.bf16.msra.mxu0 %v1460
    %1485 = vmatprep.subr.bf16.mxu0 0
    %1486 = vmatpush1.bf16.msra.mxu0 0
    %1487 = vmatprep.subr.bf16.mxu0 0
    %1488 = vmatpush1.bf16.msra.mxu0 0
    %1489 = vmatprep.subr.bf16.mxu0 0
    %1490 = vmatpush1.bf16.msra.mxu0 0
    %1491 = vmatprep.subr.bf16.mxu0 0
    %1492 = vmatpush1.bf16.msra.mxu0 0
    %1493 = vmatprep.subr.bf16.mxu0 0
    %1494 = vmatpush1.bf16.msra.mxu0 0
    %1495 = vmatprep.subr.bf16.mxu0 0
    %1496 = vmatpush1.bf16.msra.mxu0 0
    %1497 = vmatprep.subr.bf16.mxu0 0
    %1498 = vmatpush1.bf16.msra.mxu0 0
    %1499 = vmatprep.subr.bf16.mxu0 0
    %1500 = vmatpush1.bf16.msra.mxu0 0
    %1501 = vmatprep.mubr.bf16.mxu0 0
    %1502 = vmatmul.mubr.bf16.gmra.mrb[0].mxu0 %v1397
    %v1503 = vpop.f32.mrb[0].mxu0
    %v1504 = vadd.f32 %v1419, %v1503
    %v1505 = vpop.f32.mrb[0].mxu0
    %v1506 = vpop.f32.mrb[0].mxu0
    %v1507 = vpop.f32.mrb[0].mxu0
    %1508 = vdwg.mxu0
    %v1509 = vpack.c.bf16 %v1504, %v1504
    %v1510 = vld [vmem:[%s10] sm:$0xf]
    %v1511 = vld [vmem:[%s10 + $0x4] sm:$0xf]
    %v1512 = vld [vmem:[%s10 + $0x8] sm:$0xf]
    %v1513 = vld [vmem:[%s10 + $0xc] sm:$0xf]
    %v1514 = vld [vmem:[%s10 + $0x10] sm:$0xf]
    %v1515 = vld [vmem:[%s10 + $0x14] sm:$0xf]
    %v1516 = vld [vmem:[%s10 + $0x18] sm:$0xf]
    %v1517 = vld [vmem:[%s10 + $0x1c] sm:$0xf]
    %v1518 = vld [vmem:[%s11] sm:$0x1]
    %v1520 = vlaneseq
    %v1521 = vshrl.u32 %v1520, 7
    %v1522 = vsub.s32 0, %v1521
    %v1523 = vrot.slane %v1518, %v1522
    %v1533 = vunpack.c.l.b16 %v1510
    %v1534 = vunpack.c.l.b16 %v1511
    %v1535 = vunpack.c.l.b16 %v1512
    %v1536 = vunpack.c.l.b16 %v1513
    %v1537 = vunpack.c.l.b16 %v1514
    %v1538 = vunpack.c.l.b16 %v1515
    %v1539 = vunpack.c.l.b16 %v1516
    %v1540 = vunpack.c.l.b16 %v1517
    %v1541 = vpack.c.b16 %v1534, %v1533
    %v1542 = vpack.c.b16 %v1536, %v1535
    %v1543 = vpack.c.b16 %v1538, %v1537
    %v1544 = vpack.c.b16 %v1540, %v1539
    %vm1549 = vcmask 523264
    %v1551 = vsel %vm1549, %v1509, 0
    %1553 = vmatprep.subr.bf16.mxu0 0
    %1554 = vmatpush1.bf16.msra.mxu0 %v1541
    %1555 = vmatprep.subr.bf16.mxu0 0
    %1556 = vmatpush1.bf16.msra.mxu0 %v1542
    %1557 = vmatprep.subr.bf16.mxu0 0
    %1558 = vmatpush1.bf16.msra.mxu0 %v1543
    %1559 = vmatprep.subr.bf16.mxu0 0
    %1560 = vmatpush1.bf16.msra.mxu0 %v1544
    %1561 = vmatprep.subr.bf16.mxu0 0
    %1562 = vmatpush1.bf16.msra.mxu0 0
    %1563 = vmatprep.subr.bf16.mxu0 0
    %1564 = vmatpush1.bf16.msra.mxu0 0
    %1565 = vmatprep.subr.bf16.mxu0 0
    %1566 = vmatpush1.bf16.msra.mxu0 0
    %1567 = vmatprep.subr.bf16.mxu0 0
    %1568 = vmatpush1.bf16.msra.mxu0 0
    %1569 = vmatprep.subr.bf16.mxu0 0
    %1570 = vmatpush1.bf16.msra.mxu0 0
    %1571 = vmatprep.subr.bf16.mxu0 0
    %1572 = vmatpush1.bf16.msra.mxu0 0
    %1573 = vmatprep.subr.bf16.mxu0 0
    %1574 = vmatpush1.bf16.msra.mxu0 0
    %1575 = vmatprep.subr.bf16.mxu0 0
    %1576 = vmatpush1.bf16.msra.mxu0 0
    %1577 = vmatprep.subr.bf16.mxu0 0
    %1578 = vmatpush1.bf16.msra.mxu0 0
    %1579 = vmatprep.subr.bf16.mxu0 0
    %1580 = vmatpush1.bf16.msra.mxu0 0
    %1581 = vmatprep.subr.bf16.mxu0 0
    %1582 = vmatpush1.bf16.msra.mxu0 0
    %1583 = vmatprep.subr.bf16.mxu0 0
    %1584 = vmatpush1.bf16.msra.mxu0 0
    %1585 = vmatprep.mubr.bf16.mxu0 0
    %1586 = vmatmul.mubr.bf16.gmra.mrb[0].mxu0 %v1551
    %v1587 = vpop.f32.mrb[0].mxu0
    %v1588 = vadd.f32 %v1523, %v1587
    %v1589 = vpop.f32.mrb[0].mxu0
    %v1590 = vpop.f32.mrb[0].mxu0
    %v1591 = vpop.f32.mrb[0].mxu0
    %1592 = vdwg.mxu0
    %vm1593 = vcmp.ge.f32.partialorder %v1588, 0.0
    %v1594 = vmul.f32 %v1588, 0.01
    %v1595 = vsel %vm1593, %v1588, %v1594
    %vm1596 = vcmask 123904
    %1597 = vst.msk [vmem:[#allocation23] sm:$0x3] %vm1596, %v1595
    %1599 = vrot.lane.b32.xlu0 %v1595, 112
    %v1600 = vpop.permute.xlu0 %1599
    %1602 = vst.msk [vmem:[#allocation24] sm:$0x3] %vm1596, %v1600
    %v1603 = vld [vmem:[%s1] sm:$0x1]
    %v1604 = vmul.f32 %v1595, 0.5
    %v1605 = vmul.f32 %v1604, 1.442695
    %v1606 = vpow.pop %v1605
    %v1608 = vlaneseq
    %v1609 = vshrl.u32 %v1608, 7
    %v1610 = vsub.s32 0, %v1609
    %v1611 = vrot.slane %v1603, %v1610
    %1614 = vrot.lane.b32.xlu0 %v1606, 112
    %v1615 = vpop.permute.xlu0 %1614
    %v1617 = vmul.f32 %v1611, %v1615
    %v1618 = vadd.f32 %v1595, %v1617
    %v1619 = vpack.c.bf16 %v1618, %v1618
    %v1620 = vld [vmem:[#allocation11] sm:$0xf]
    %v1621 = vld [vmem:[#allocation11 + $0x4] sm:$0xf]
    %v1622 = vld [vmem:[#allocation13] sm:$0x1]
    %v1624 = vlaneseq
    %v1625 = vshrl.u32 %v1624, 7
    %v1626 = vsub.s32 0, %v1625
    %v1627 = vrot.slane %v1622, %v1626
    %v1631 = vunpack.c.l.b16 %v1620
    %v1632 = vunpack.c.l.b16 %v1621
    %v1633 = vpack.c.b16 %v1632, %v1631
    %vm1635 = vcmask 130048
    %v1637 = vsel %vm1635, %v1619, 0
    %1639 = vmatprep.subr.bf16.mxu0 0
    %1640 = vmatpush1.bf16.msra.mxu0 %v1633
    %1641 = vmatprep.subr.bf16.mxu0 0
    %1642 = vmatpush1.bf16.msra.mxu0 0
    %1643 = vmatprep.subr.bf16.mxu0 0
    %1644 = vmatpush1.bf16.msra.mxu0 0
    %1645 = vmatprep.subr.bf16.mxu0 0
    %1646 = vmatpush1.bf16.msra.mxu0 0
    %1647 = vmatprep.subr.bf16.mxu0 0
    %1648 = vmatpush1.bf16.msra.mxu0 0
    %1649 = vmatprep.subr.bf16.mxu0 0
    %1650 = vmatpush1.bf16.msra.mxu0 0
    %1651 = vmatprep.subr.bf16.mxu0 0
    %1652 = vmatpush1.bf16.msra.mxu0 0
    %1653 = vmatprep.subr.bf16.mxu0 0
    %1654 = vmatpush1.bf16.msra.mxu0 0
    %1655 = vmatprep.subr.bf16.mxu0 0
    %1656 = vmatpush1.bf16.msra.mxu0 0
    %1657 = vmatprep.subr.bf16.mxu0 0
    %1658 = vmatpush1.bf16.msra.mxu0 0
    %1659 = vmatprep.subr.bf16.mxu0 0
    %1660 = vmatpush1.bf16.msra.mxu0 0
    %1661 = vmatprep.subr.bf16.mxu0 0
    %1662 = vmatpush1.bf16.msra.mxu0 0
    %1663 = vmatprep.subr.bf16.mxu0 0
    %1664 = vmatpush1.bf16.msra.mxu0 0
    %1665 = vmatprep.subr.bf16.mxu0 0
    %1666 = vmatpush1.bf16.msra.mxu0 0
    %1667 = vmatprep.subr.bf16.mxu0 0
    %1668 = vmatpush1.bf16.msra.mxu0 0
    %1669 = vmatprep.subr.bf16.mxu0 0
    %1670 = vmatpush1.bf16.msra.mxu0 0
    %1671 = vmatprep.mubr.bf16.mxu0 0
    %1672 = vmatmul.mubr.bf16.gmra.mrb[0].mxu0 %v1637
    %v1673 = vpop.f32.mrb[0].mxu0
    %v1674 = vadd.f32 %v1627, %v1673
    %v1675 = vpop.f32.mrb[0].mxu0
    %v1676 = vpop.f32.mrb[0].mxu0
    %v1677 = vpop.f32.mrb[0].mxu0
    %1678 = vdwg.mxu0
    %vm1679 = vcmp.ge.f32.partialorder %v1674, 0.0
    %v1680 = vmul.f32 %v1674, 0.01
    %v1681 = vsel %vm1679, %v1674, %v1680
    %v1682 = vpack.c.bf16 %v1681, %v1681
    %v1683 = vld [vmem:[%s14] sm:$0xf]
    %v1684 = vld [vmem:[%s14 + $0x4] sm:$0xf]
    %v1685 = vld [vmem:[%s14 + $0x8] sm:$0xf]
    %v1686 = vld [vmem:[%s14 + $0xc] sm:$0xf]
    %v1687 = vld [vmem:[%s14 + $0x10] sm:$0xf]
    %v1688 = vld [vmem:[%s14 + $0x14] sm:$0xf]
    %v1689 = vld [vmem:[%s14 + $0x18] sm:$0xf]
    %v1690 = vld [vmem:[%s14 + $0x1c] sm:$0xf]
    %v1691 = vld [vmem:[#allocation14] sm:$0x1]
    %v1693 = vlaneseq
    %v1694 = vshrl.u32 %v1693, 7
    %v1695 = vsub.s32 0, %v1694
    %v1696 = vrot.slane %v1691, %v1695
    %v1706 = vunpack.c.l.b16 %v1683
    %v1707 = vunpack.c.l.b16 %v1684
    %v1708 = vunpack.c.l.b16 %v1685
    %v1709 = vunpack.c.l.b16 %v1686
    %v1710 = vunpack.c.l.b16 %v1687
    %v1711 = vunpack.c.l.b16 %v1688
    %v1712 = vunpack.c.l.b16 %v1689
    %v1713 = vunpack.c.l.b16 %v1690
    %v1714 = vpack.c.b16 %v1707, %v1706
    %v1715 = vpack.c.b16 %v1709, %v1708
    %v1716 = vpack.c.b16 %v1711, %v1710
    %v1717 = vpack.c.b16 %v1713, %v1712
    %v1723 = vsel %vm1549, %v1682, 0
    %1725 = vmatprep.subr.bf16.mxu0 0
    %1726 = vmatpush1.bf16.msra.mxu0 %v1714
    %1727 = vmatprep.subr.bf16.mxu0 0
    %1728 = vmatpush1.bf16.msra.mxu0 %v1715
    %1729 = vmatprep.subr.bf16.mxu0 0
    %1730 = vmatpush1.bf16.msra.mxu0 %v1716
    %1731 = vmatprep.subr.bf16.mxu0 0
    %1732 = vmatpush1.bf16.msra.mxu0 %v1717
    %1733 = vmatprep.subr.bf16.mxu0 0
    %1734 = vmatpush1.bf16.msra.mxu0 0
    %1735 = vmatprep.subr.bf16.mxu0 0
    %1736 = vmatpush1.bf16.msra.mxu0 0
    %1737 = vmatprep.subr.bf16.mxu0 0
    %1738 = vmatpush1.bf16.msra.mxu0 0
    %1739 = vmatprep.subr.bf16.mxu0 0
    %1740 = vmatpush1.bf16.msra.mxu0 0
    %1741 = vmatprep.subr.bf16.mxu0 0
    %1742 = vmatpush1.bf16.msra.mxu0 0
    %1743 = vmatprep.subr.bf16.mxu0 0
    %1744 = vmatpush1.bf16.msra.mxu0 0
    %1745 = vmatprep.subr.bf16.mxu0 0
    %1746 = vmatpush1.bf16.msra.mxu0 0
    %1747 = vmatprep.subr.bf16.mxu0 0
    %1748 = vmatpush1.bf16.msra.mxu0 0
    %1749 = vmatprep.subr.bf16.mxu0 0
    %1750 = vmatpush1.bf16.msra.mxu0 0
    %1751 = vmatprep.subr.bf16.mxu0 0
    %1752 = vmatpush1.bf16.msra.mxu0 0
    %1753 = vmatprep.subr.bf16.mxu0 0
    %1754 = vmatpush1.bf16.msra.mxu0 0
    %1755 = vmatprep.subr.bf16.mxu0 0
    %1756 = vmatpush1.bf16.msra.mxu0 0
    %1757 = vmatprep.mubr.bf16.mxu0 0
    %1758 = vmatmul.mubr.bf16.gmra.mrb[0].mxu0 %v1723
    %v1759 = vpop.f32.mrb[0].mxu0
    %v1760 = vadd.f32 %v1696, %v1759
    %v1761 = vpop.f32.mrb[0].mxu0
    %v1762 = vpop.f32.mrb[0].mxu0
    %v1763 = vpop.f32.mrb[0].mxu0
    %1764 = vdwg.mxu0
    %v1765 = vpack.c.bf16 %v1760, %v1760
    %v1766 = vld [vmem:[#allocation16] sm:$0xff]
    %v1767 = vld [vmem:[#allocation16 + $0x8] sm:$0xff]
    %v1768 = vld [vmem:[#allocation16 + $0x10] sm:$0xff]
    %v1769 = vld [vmem:[#allocation16 + $0x18] sm:$0xff]
    %v1770 = vld [vmem:[#allocation16 + $0x20] sm:$0xff]
    %v1771 = vld [vmem:[#allocation16 + $0x28] sm:$0xff]
    %v1772 = vld [vmem:[#allocation16 + $0x30] sm:$0xff]
    %v1773 = vld [vmem:[#allocation16 + $0x38] sm:$0xff]
    %v1774 = vld [vmem:[#allocation16 + $0x40] sm:$0xff]
    %v1775 = vld [vmem:[#allocation16 + $0x48] sm:$0xff]
    %v1776 = vld [vmem:[#allocation16 + $0x50] sm:$0xff]
    %v1777 = vld [vmem:[#allocation16 + $0x58] sm:$0xff]
    %v1778 = vld [vmem:[#allocation16 + $0x60] sm:$0xff]
    %v1779 = vld [vmem:[#allocation16 + $0x68] sm:$0xff]
    %v1780 = vld [vmem:[#allocation16 + $0x70] sm:$0xff]
    %v1781 = vld [vmem:[#allocation16 + $0x78] sm:$0xff]
    %v1782 = vld [vmem:[#allocation17] sm:$0x3]
    %v1784 = vlaneseq
    %v1785 = vshrl.u32 %v1784, 7
    %v1786 = vsub.s32 0, %v1785
    %v1787 = vrot.slane %v1782, %v1786
    %v1788 = vlaneseq
    %v1789 = vshrl.u32 %v1788, 7
    %v1790 = vsub.s32 1, %v1789
    %v1791 = vrot.slane %v1782, %v1790
    %v1810 = vunpack.c.l.b16 %v1766
    %v1811 = vunpack.c.h.b16 %v1766
    %v1812 = vunpack.c.l.b16 %v1767
    %v1813 = vunpack.c.h.b16 %v1767
    %v1814 = vunpack.c.l.b16 %v1768
    %v1815 = vunpack.c.h.b16 %v1768
    %v1816 = vunpack.c.l.b16 %v1769
    %v1817 = vunpack.c.h.b16 %v1769
    %v1818 = vunpack.c.l.b16 %v1770
    %v1819 = vunpack.c.h.b16 %v1770
    %v1820 = vunpack.c.l.b16 %v1771
    %v1821 = vunpack.c.h.b16 %v1771
    %v1822 = vunpack.c.l.b16 %v1772
    %v1823 = vunpack.c.h.b16 %v1772
    %v1824 = vunpack.c.l.b16 %v1773
    %v1825 = vunpack.c.h.b16 %v1773
    %v1826 = vunpack.c.l.b16 %v1774
    %v1827 = vunpack.c.h.b16 %v1774
    %v1828 = vunpack.c.l.b16 %v1775
    %v1829 = vunpack.c.h.b16 %v1775
    %v1830 = vunpack.c.l.b16 %v1776
    %v1831 = vunpack.c.h.b16 %v1776
    %v1832 = vunpack.c.l.b16 %v1777
    %v1833 = vunpack.c.h.b16 %v1777
    %v1834 = vunpack.c.l.b16 %v1778
    %v1835 = vunpack.c.h.b16 %v1778
    %v1836 = vunpack.c.l.b16 %v1779
    %v1837 = vunpack.c.h.b16 %v1779
    %v1838 = vunpack.c.l.b16 %v1780
    %v1839 = vunpack.c.h.b16 %v1780
    %v1840 = vunpack.c.l.b16 %v1781
    %v1841 = vunpack.c.h.b16 %v1781
    %v1842 = vpack.c.b16 %v1812, %v1810
    %v1843 = vpack.c.b16 %v1813, %v1811
    %v1844 = vpack.c.b16 %v1816, %v1814
    %v1845 = vpack.c.b16 %v1817, %v1815
    %v1846 = vpack.c.b16 %v1820, %v1818
    %v1847 = vpack.c.b16 %v1821, %v1819
    %v1848 = vpack.c.b16 %v1824, %v1822
    %v1849 = vpack.c.b16 %v1825, %v1823
    %v1850 = vpack.c.b16 %v1828, %v1826
    %v1851 = vpack.c.b16 %v1829, %v1827
    %v1852 = vpack.c.b16 %v1832, %v1830
    %v1853 = vpack.c.b16 %v1833, %v1831
    %v1854 = vpack.c.b16 %v1836, %v1834
    %v1855 = vpack.c.b16 %v1837, %v1835
    %v1856 = vpack.c.b16 %v1840, %v1838
    %v1857 = vpack.c.b16 %v1841, %v1839
    %1874 = vmatprep.subr.bf16.mxu0 %v1843
    %1875 = vmatpush1.bf16.msra.mxu0 %v1842
    %1876 = vmatprep.subr.bf16.mxu0 %v1845
    %1877 = vmatpush1.bf16.msra.mxu0 %v1844
    %1878 = vmatprep.subr.bf16.mxu0 %v1847
    %1879 = vmatpush1.bf16.msra.mxu0 %v1846
    %1880 = vmatprep.subr.bf16.mxu0 %v1849
    %1881 = vmatpush1.bf16.msra.mxu0 %v1848
    %1882 = vmatprep.subr.bf16.mxu0 %v1851
    %1883 = vmatpush1.bf16.msra.mxu0 %v1850
    %1884 = vmatprep.subr.bf16.mxu0 %v1853
    %1885 = vmatpush1.bf16.msra.mxu0 %v1852
    %1886 = vmatprep.subr.bf16.mxu0 %v1855
    %1887 = vmatpush1.bf16.msra.mxu0 %v1854
    %1888 = vmatprep.subr.bf16.mxu0 %v1857
    %1889 = vmatpush1.bf16.msra.mxu0 %v1856
    %1890 = vmatprep.subr.bf16.mxu0 0
    %1891 = vmatpush1.bf16.msra.mxu0 0
    %1892 = vmatprep.subr.bf16.mxu0 0
    %1893 = vmatpush1.bf16.msra.mxu0 0
    %1894 = vmatprep.subr.bf16.mxu0 0
    %1895 = vmatpush1.bf16.msra.mxu0 0
    %1896 = vmatprep.subr.bf16.mxu0 0
    %1897 = vmatpush1.bf16.msra.mxu0 0
    %1898 = vmatprep.subr.bf16.mxu0 0
    %1899 = vmatpush1.bf16.msra.mxu0 0
    %1900 = vmatprep.subr.bf16.mxu0 0
    %1901 = vmatpush1.bf16.msra.mxu0 0
    %1902 = vmatprep.subr.bf16.mxu0 0
    %1903 = vmatpush1.bf16.msra.mxu0 0
    %1904 = vmatprep.subr.bf16.mxu0 0
    %1905 = vmatpush1.bf16.msra.mxu0 0
    %1906 = vmatprep.mubr.bf16.mxu0 0
    %1907 = vmatmul.mubr.bf16.gmra.mrb[0].mxu0 %v1765
    %v1908 = vpop.f32.mrb[0].mxu0
    %v1909 = vadd.f32 %v1787, %v1908
    %v1910 = vpop.f32.mrb[0].mxu0
    %v1911 = vadd.f32 %v1791, %v1910
    %v1912 = vpop.f32.mrb[0].mxu0
    %v1913 = vpop.f32.mrb[0].mxu0
    %1914 = vdwg.mxu0
    %v1915 = vpack.c.bf16 %v1909, %v1909
    %v1916 = vpack.c.bf16 %v1911, %v1911
    %v1917 = vld [vmem:[#allocation19] sm:$0xff]
    %v1918 = vld [vmem:[#allocation19 + $0x8] sm:$0xff]
    %v1919 = vld [vmem:[#allocation19 + $0x10] sm:$0xff]
    %v1920 = vld [vmem:[#allocation19 + $0x18] sm:$0xff]
    %v1921 = vld [vmem:[#allocation19 + $0x20] sm:$0xff]
    %v1922 = vld [vmem:[#allocation19 + $0x28] sm:$0xff]
    %v1923 = vld [vmem:[#allocation19 + $0x30] sm:$0xff]
    %v1924 = vld [vmem:[#allocation19 + $0x38] sm:$0xff]
    %v1925 = vld [vmem:[#allocation19 + $0x40] sm:$0xff]
    %v1926 = vld [vmem:[#allocation19 + $0x48] sm:$0xff]
    %v1927 = vld [vmem:[#allocation19 + $0x50] sm:$0xff]
    %v1928 = vld [vmem:[#allocation19 + $0x58] sm:$0xff]
    %v1929 = vld [vmem:[#allocation19 + $0x60] sm:$0xff]
    %v1930 = vld [vmem:[#allocation19 + $0x68] sm:$0xff]
    %v1931 = vld [vmem:[#allocation19 + $0x70] sm:$0xff]
    %v1932 = vld [vmem:[#allocation19 + $0x78] sm:$0xff]
    %v1933 = vld [vmem:[#allocation19 + $0x80] sm:$0xff]
    %v1934 = vld [vmem:[#allocation19 + $0x88] sm:$0xff]
    %v1935 = vld [vmem:[#allocation19 + $0x90] sm:$0xff]
    %v1936 = vld [vmem:[#allocation19 + $0x98] sm:$0xff]
    %v1937 = vld [vmem:[#allocation19 + $0xa0] sm:$0xff]
    %v1938 = vld [vmem:[#allocation19 + $0xa8] sm:$0xff]
    %v1939 = vld [vmem:[#allocation19 + $0xb0] sm:$0xff]
    %v1940 = vld [vmem:[#allocation19 + $0xb8] sm:$0xff]
    %v1941 = vld [vmem:[#allocation19 + $0xc0] sm:$0xff]
    %v1942 = vld [vmem:[#allocation19 + $0xc8] sm:$0xff]
    %v1943 = vld [vmem:[#allocation19 + $0xd0] sm:$0xff]
    %v1944 = vld [vmem:[#allocation19 + $0xd8] sm:$0xff]
    %v1945 = vld [vmem:[#allocation19 + $0xe0] sm:$0xff]
    %v1946 = vld [vmem:[#allocation19 + $0xe8] sm:$0xff]
    %v1947 = vld [vmem:[#allocation19 + $0xf0] sm:$0xff]
    %v1948 = vld [vmem:[#allocation19 + $0xf8] sm:$0xff]
    %v1949 = vld [vmem:[#allocation19 + $0x100] sm:$0xff]
    %v1950 = vld [vmem:[#allocation19 + $0x108] sm:$0xff]
    %v1951 = vld [vmem:[#allocation19 + $0x110] sm:$0xff]
    %v1952 = vld [vmem:[#allocation19 + $0x118] sm:$0xff]
    %v1953 = vld [vmem:[#allocation19 + $0x120] sm:$0xff]
    %v1954 = vld [vmem:[#allocation19 + $0x128] sm:$0xff]
    %v1955 = vld [vmem:[#allocation19 + $0x130] sm:$0xff]
    %v1956 = vld [vmem:[#allocation19 + $0x138] sm:$0xff]
    %v1957 = vld [vmem:[#allocation19 + $0x140] sm:$0xff]
    %v1958 = vld [vmem:[#allocation19 + $0x148] sm:$0xff]
    %v1959 = vld [vmem:[#allocation19 + $0x150] sm:$0xff]
    %v1960 = vld [vmem:[#allocation19 + $0x158] sm:$0xff]
    %v1961 = vld [vmem:[#allocation19 + $0x160] sm:$0xff]
    %v1962 = vld [vmem:[#allocation19 + $0x168] sm:$0xff]
    %v1963 = vld [vmem:[#allocation19 + $0x170] sm:$0xff]
    %v1964 = vld [vmem:[#allocation19 + $0x178] sm:$0xff]
    %v1965 = vld [vmem:[#allocation19 + $0x180] sm:$0xff]
    %v1966 = vld [vmem:[#allocation19 + $0x188] sm:$0xff]
    %v1967 = vld [vmem:[#allocation19 + $0x190] sm:$0xff]
    %v1968 = vld [vmem:[#allocation19 + $0x198] sm:$0xff]
    %v1969 = vld [vmem:[#allocation19 + $0x1a0] sm:$0xff]
    %v1970 = vld [vmem:[#allocation19 + $0x1a8] sm:$0xff]
    %v1971 = vld [vmem:[#allocation19 + $0x1b0] sm:$0xff]
    %v1972 = vld [vmem:[#allocation19 + $0x1b8] sm:$0xff]
    %v1973 = vld [vmem:[#allocation19 + $0x1c0] sm:$0xff]
    %v1974 = vld [vmem:[#allocation19 + $0x1c8] sm:$0xff]
    %v1975 = vld [vmem:[#allocation19 + $0x1d0] sm:$0xff]
    %v1976 = vld [vmem:[#allocation19 + $0x1d8] sm:$0xff]
    %v1977 = vld [vmem:[#allocation19 + $0x1e0] sm:$0xff]
    %v1978 = vld [vmem:[#allocation19 + $0x1e8] sm:$0xff]
    %v1979 = vld [vmem:[#allocation19 + $0x1f0] sm:$0xff]
    %v1980 = vld [vmem:[#allocation19 + $0x1f8] sm:$0xff]
    %v1981 = vld [vmem:[#allocation20] sm:$0xf]
    %v1983 = vlaneseq
    %v1984 = vshrl.u32 %v1983, 7
    %v1985 = vsub.s32 0, %v1984
    %v1986 = vrot.slane %v1981, %v1985
    %v1987 = vlaneseq
    %v1988 = vshrl.u32 %v1987, 7
    %v1989 = vsub.s32 1, %v1988
    %v1990 = vrot.slane %v1981, %v1989
    %v1991 = vlaneseq
    %v1992 = vshrl.u32 %v1991, 7
    %v1993 = vsub.s32 2, %v1992
    %v1994 = vrot.slane %v1981, %v1993
    %v1995 = vlaneseq
    %v1996 = vshrl.u32 %v1995, 7
    %v1997 = vsub.s32 3, %v1996
    %v1998 = vrot.slane %v1981, %v1997
    %v2067 = vunpack.c.l.b16 %v1917
    %v2068 = vunpack.c.h.b16 %v1917
    %v2069 = vunpack.c.l.b16 %v1918
    %v2070 = vunpack.c.h.b16 %v1918
    %v2071 = vunpack.c.l.b16 %v1919
    %v2072 = vunpack.c.h.b16 %v1919
    %v2073 = vunpack.c.l.b16 %v1920
    %v2074 = vunpack.c.h.b16 %v1920
    %v2075 = vunpack.c.l.b16 %v1921
    %v2076 = vunpack.c.h.b16 %v1921
    %v2077 = vunpack.c.l.b16 %v1922
    %v2078 = vunpack.c.h.b16 %v1922
    %v2079 = vunpack.c.l.b16 %v1923
    %v2080 = vunpack.c.h.b16 %v1923
    %v2081 = vunpack.c.l.b16 %v1924
    %v2082 = vunpack.c.h.b16 %v1924
    %v2083 = vunpack.c.l.b16 %v1925
    %v2084 = vunpack.c.h.b16 %v1925
    %v2085 = vunpack.c.l.b16 %v1926
    %v2086 = vunpack.c.h.b16 %v1926
    %v2087 = vunpack.c.l.b16 %v1927
    %v2088 = vunpack.c.h.b16 %v1927
    %v2089 = vunpack.c.l.b16 %v1928
    %v2090 = vunpack.c.h.b16 %v1928
    %v2091 = vunpack.c.l.b16 %v1929
    %v2092 = vunpack.c.h.b16 %v1929
    %v2093 = vunpack.c.l.b16 %v1930
    %v2094 = vunpack.c.h.b16 %v1930
    %v2095 = vunpack.c.l.b16 %v1931
    %v2096 = vunpack.c.h.b16 %v1931
    %v2097 = vunpack.c.l.b16 %v1932
    %v2098 = vunpack.c.h.b16 %v1932
    %v2099 = vunpack.c.l.b16 %v1933
    %v2100 = vunpack.c.h.b16 %v1933
    %v2101 = vunpack.c.l.b16 %v1934
    %v2102 = vunpack.c.h.b16 %v1934
    %v2103 = vunpack.c.l.b16 %v1935
    %v2104 = vunpack.c.h.b16 %v1935
    %v2105 = vunpack.c.l.b16 %v1936
    %v2106 = vunpack.c.h.b16 %v1936
    %v2107 = vunpack.c.l.b16 %v1937
    %v2108 = vunpack.c.h.b16 %v1937
    %v2109 = vunpack.c.l.b16 %v1938
    %v2110 = vunpack.c.h.b16 %v1938
    %v2111 = vunpack.c.l.b16 %v1939
    %v2112 = vunpack.c.h.b16 %v1939
    %v2113 = vunpack.c.l.b16 %v1940
    %v2114 = vunpack.c.h.b16 %v1940
    %v2115 = vunpack.c.l.b16 %v1941
    %v2116 = vunpack.c.h.b16 %v1941
    %v2117 = vunpack.c.l.b16 %v1942
    %v2118 = vunpack.c.h.b16 %v1942
    %v2119 = vunpack.c.l.b16 %v1943
    %v2120 = vunpack.c.h.b16 %v1943
    %v2121 = vunpack.c.l.b16 %v1944
    %v2122 = vunpack.c.h.b16 %v1944
    %v2123 = vunpack.c.l.b16 %v1945
    %v2124 = vunpack.c.h.b16 %v1945
    %v2125 = vunpack.c.l.b16 %v1946
    %v2126 = vunpack.c.h.b16 %v1946
    %v2127 = vunpack.c.l.b16 %v1947
    %v2128 = vunpack.c.h.b16 %v1947
    %v2129 = vunpack.c.l.b16 %v1948
    %v2130 = vunpack.c.h.b16 %v1948
    %v2131 = vunpack.c.l.b16 %v1949
    %v2132 = vunpack.c.h.b16 %v1949
    %v2133 = vunpack.c.l.b16 %v1950
    %v2134 = vunpack.c.h.b16 %v1950
    %v2135 = vunpack.c.l.b16 %v1951
    %v2136 = vunpack.c.h.b16 %v1951
    %v2137 = vunpack.c.l.b16 %v1952
    %v2138 = vunpack.c.h.b16 %v1952
    %v2139 = vunpack.c.l.b16 %v1953
    %v2140 = vunpack.c.h.b16 %v1953
    %v2141 = vunpack.c.l.b16 %v1954
    %v2142 = vunpack.c.h.b16 %v1954
    %v2143 = vunpack.c.l.b16 %v1955
    %v2144 = vunpack.c.h.b16 %v1955
    %v2145 = vunpack.c.l.b16 %v1956
    %v2146 = vunpack.c.h.b16 %v1956
    %v2147 = vunpack.c.l.b16 %v1957
    %v2148 = vunpack.c.h.b16 %v1957
    %v2149 = vunpack.c.l.b16 %v1958
    %v2150 = vunpack.c.h.b16 %v1958
    %v2151 = vunpack.c.l.b16 %v1959
    %v2152 = vunpack.c.h.b16 %v1959
    %v2153 = vunpack.c.l.b16 %v1960
    %v2154 = vunpack.c.h.b16 %v1960
    %v2155 = vunpack.c.l.b16 %v1961
    %v2156 = vunpack.c.h.b16 %v1961
    %v2157 = vunpack.c.l.b16 %v1962
    %v2158 = vunpack.c.h.b16 %v1962
    %v2159 = vunpack.c.l.b16 %v1963
    %v2160 = vunpack.c.h.b16 %v1963
    %v2161 = vunpack.c.l.b16 %v1964
    %v2162 = vunpack.c.h.b16 %v1964
    %v2163 = vunpack.c.l.b16 %v1965
    %v2164 = vunpack.c.h.b16 %v1965
    %v2165 = vunpack.c.l.b16 %v1966
    %v2166 = vunpack.c.h.b16 %v1966
    %v2167 = vunpack.c.l.b16 %v1967
    %v2168 = vunpack.c.h.b16 %v1967
    %v2169 = vunpack.c.l.b16 %v1968
    %v2170 = vunpack.c.h.b16 %v1968
    %v2171 = vunpack.c.l.b16 %v1969
    %v2172 = vunpack.c.h.b16 %v1969
    %v2173 = vunpack.c.l.b16 %v1970
    %v2174 = vunpack.c.h.b16 %v1970
    %v2175 = vunpack.c.l.b16 %v1971
    %v2176 = vunpack.c.h.b16 %v1971
    %v2177 = vunpack.c.l.b16 %v1972
    %v2178 = vunpack.c.h.b16 %v1972
    %v2179 = vunpack.c.l.b16 %v1973
    %v2180 = vunpack.c.h.b16 %v1973
    %v2181 = vunpack.c.l.b16 %v1974
    %v2182 = vunpack.c.h.b16 %v1974
    %v2183 = vunpack.c.l.b16 %v1975
    %v2184 = vunpack.c.h.b16 %v1975
    %v2185 = vunpack.c.l.b16 %v1976
    %v2186 = vunpack.c.h.b16 %v1976
    %v2187 = vunpack.c.l.b16 %v1977
    %v2188 = vunpack.c.h.b16 %v1977
    %v2189 = vunpack.c.l.b16 %v1978
    %v2190 = vunpack.c.h.b16 %v1978
    %v2191 = vunpack.c.l.b16 %v1979
    %v2192 = vunpack.c.h.b16 %v1979
    %v2193 = vunpack.c.l.b16 %v1980
    %v2194 = vunpack.c.h.b16 %v1980
    %v2195 = vpack.c.b16 %v2071, %v2067
    %v2196 = vpack.c.b16 %v2072, %v2068
    %v2197 = vpack.c.b16 %v2073, %v2069
    %v2198 = vpack.c.b16 %v2074, %v2070
    %v2199 = vpack.c.b16 %v2079, %v2075
    %v2200 = vpack.c.b16 %v2080, %v2076
    %v2201 = vpack.c.b16 %v2081, %v2077
    %v2202 = vpack.c.b16 %v2082, %v2078
    %v2203 = vpack.c.b16 %v2087, %v2083
    %v2204 = vpack.c.b16 %v2088, %v2084
    %v2205 = vpack.c.b16 %v2089, %v2085
    %v2206 = vpack.c.b16 %v2090, %v2086
    %v2207 = vpack.c.b16 %v2095, %v2091
    %v2208 = vpack.c.b16 %v2096, %v2092
    %v2209 = vpack.c.b16 %v2097, %v2093
    %v2210 = vpack.c.b16 %v2098, %v2094
    %v2211 = vpack.c.b16 %v2103, %v2099
    %v2212 = vpack.c.b16 %v2104, %v2100
    %v2213 = vpack.c.b16 %v2105, %v2101
    %v2214 = vpack.c.b16 %v2106, %v2102
    %v2215 = vpack.c.b16 %v2111, %v2107
    %v2216 = vpack.c.b16 %v2112, %v2108
    %v2217 = vpack.c.b16 %v2113, %v2109
    %v2218 = vpack.c.b16 %v2114, %v2110
    %v2219 = vpack.c.b16 %v2119, %v2115
    %v2220 = vpack.c.b16 %v2120, %v2116
    %v2221 = vpack.c.b16 %v2121, %v2117
    %v2222 = vpack.c.b16 %v2122, %v2118
    %v2223 = vpack.c.b16 %v2127, %v2123
    %v2224 = vpack.c.b16 %v2128, %v2124
    %v2225 = vpack.c.b16 %v2129, %v2125
    %v2226 = vpack.c.b16 %v2130, %v2126
    %v2227 = vpack.c.b16 %v2135, %v2131
    %v2228 = vpack.c.b16 %v2136, %v2132
    %v2229 = vpack.c.b16 %v2137, %v2133
    %v2230 = vpack.c.b16 %v2138, %v2134
    %v2231 = vpack.c.b16 %v2143, %v2139
    %v2232 = vpack.c.b16 %v2144, %v2140
    %v2233 = vpack.c.b16 %v2145, %v2141
    %v2234 = vpack.c.b16 %v2146, %v2142
    %v2235 = vpack.c.b16 %v2151, %v2147
    %v2236 = vpack.c.b16 %v2152, %v2148
    %v2237 = vpack.c.b16 %v2153, %v2149
    %v2238 = vpack.c.b16 %v2154, %v2150
    %v2239 = vpack.c.b16 %v2159, %v2155
    %v2240 = vpack.c.b16 %v2160, %v2156
    %v2241 = vpack.c.b16 %v2161, %v2157
    %v2242 = vpack.c.b16 %v2162, %v2158
    %v2243 = vpack.c.b16 %v2167, %v2163
    %v2244 = vpack.c.b16 %v2168, %v2164
    %v2245 = vpack.c.b16 %v2169, %v2165
    %v2246 = vpack.c.b16 %v2170, %v2166
    %v2247 = vpack.c.b16 %v2175, %v2171
    %v2248 = vpack.c.b16 %v2176, %v2172
    %v2249 = vpack.c.b16 %v2177, %v2173
    %v2250 = vpack.c.b16 %v2178, %v2174
    %v2251 = vpack.c.b16 %v2183, %v2179
    %v2252 = vpack.c.b16 %v2184, %v2180
    %v2253 = vpack.c.b16 %v2185, %v2181
    %v2254 = vpack.c.b16 %v2186, %v2182
    %v2255 = vpack.c.b16 %v2191, %v2187
    %v2256 = vpack.c.b16 %v2192, %v2188
    %v2257 = vpack.c.b16 %v2193, %v2189
    %v2258 = vpack.c.b16 %v2194, %v2190
    %2323 = vmatprep.subr.bf16.mxu0 %v2196
    %2324 = vmatpush1.bf16.msra.mxu0 %v2195
    %2325 = vmatprep.subr.bf16.mxu0 %v2200
    %2326 = vmatpush1.bf16.msra.mxu0 %v2199
    %2327 = vmatprep.subr.bf16.mxu0 %v2204
    %2328 = vmatpush1.bf16.msra.mxu0 %v2203
    %2329 = vmatprep.subr.bf16.mxu0 %v2208
    %2330 = vmatpush1.bf16.msra.mxu0 %v2207
    %2331 = vmatprep.subr.bf16.mxu0 %v2212
    %2332 = vmatpush1.bf16.msra.mxu0 %v2211
    %2333 = vmatprep.subr.bf16.mxu0 %v2216
    %2334 = vmatpush1.bf16.msra.mxu0 %v2215
    %2335 = vmatprep.subr.bf16.mxu0 %v2220
    %2336 = vmatpush1.bf16.msra.mxu0 %v2219
    %2337 = vmatprep.subr.bf16.mxu0 %v2224
    %2338 = vmatpush1.bf16.msra.mxu0 %v2223
    %2339 = vmatprep.subr.bf16.mxu0 %v2228
    %2340 = vmatpush1.bf16.msra.mxu0 %v2227
    %2341 = vmatprep.subr.bf16.mxu0 %v2232
    %2342 = vmatpush1.bf16.msra.mxu0 %v2231
    %2343 = vmatprep.subr.bf16.mxu0 %v2236
    %2344 = vmatpush1.bf16.msra.mxu0 %v2235
    %2345 = vmatprep.subr.bf16.mxu0 %v2240
    %2346 = vmatpush1.bf16.msra.mxu0 %v2239
    %2347 = vmatprep.subr.bf16.mxu0 %v2244
    %2348 = vmatpush1.bf16.msra.mxu0 %v2243
    %2349 = vmatprep.subr.bf16.mxu0 %v2248
    %2350 = vmatpush1.bf16.msra.mxu0 %v2247
    %2351 = vmatprep.subr.bf16.mxu0 %v2252
    %2352 = vmatpush1.bf16.msra.mxu0 %v2251
    %2353 = vmatprep.subr.bf16.mxu0 %v2256
    %2354 = vmatpush1.bf16.msra.mxu0 %v2255
    %2355 = vmatprep.mubr.bf16.mxu0 %v1916
    %2356 = vmatmul.mubr.bf16.gmra.mrb[0].mxu0 %v1915
    %v2357 = vpop.f32.mrb[0].mxu0
    %v2358 = vadd.f32 %v1986, %v2357
    %v2359 = vpop.f32.mrb[0].mxu0
    %v2360 = vadd.f32 %v1990, %v2359
    %v2361 = vpop.f32.mrb[0].mxu0
    %v2362 = vpop.f32.mrb[0].mxu0
    %2363 = vdwg.mxu0
    %2364 = vmatprep.subr.bf16.mxu0 %v2198
    %2365 = vmatpush1.bf16.msra.mxu0 %v2197
    %2366 = vmatprep.subr.bf16.mxu0 %v2202
    %2367 = vmatpush1.bf16.msra.mxu0 %v2201
    %2368 = vmatprep.subr.bf16.mxu0 %v2206
    %2369 = vmatpush1.bf16.msra.mxu0 %v2205
    %2370 = vmatprep.subr.bf16.mxu0 %v2210
    %2371 = vmatpush1.bf16.msra.mxu0 %v2209
    %2372 = vmatprep.subr.bf16.mxu0 %v2214
    %2373 = vmatpush1.bf16.msra.mxu0 %v2213
    %2374 = vmatprep.subr.bf16.mxu0 %v2218
    %2375 = vmatpush1.bf16.msra.mxu0 %v2217
    %2376 = vmatprep.subr.bf16.mxu0 %v2222
    %2377 = vmatpush1.bf16.msra.mxu0 %v2221
    %2378 = vmatprep.subr.bf16.mxu0 %v2226
    %2379 = vmatpush1.bf16.msra.mxu0 %v2225
    %2380 = vmatprep.subr.bf16.mxu0 %v2230
    %2381 = vmatpush1.bf16.msra.mxu0 %v2229
    %2382 = vmatprep.subr.bf16.mxu0 %v2234
    %2383 = vmatpush1.bf16.msra.mxu0 %v2233
    %2384 = vmatprep.subr.bf16.mxu0 %v2238
    %2385 = vmatpush1.bf16.msra.mxu0 %v2237
    %2386 = vmatprep.subr.bf16.mxu0 %v2242
    %2387 = vmatpush1.bf16.msra.mxu0 %v2241
    %2388 = vmatprep.subr.bf16.mxu0 %v2246
    %2389 = vmatpush1.bf16.msra.mxu0 %v2245
    %2390 = vmatprep.subr.bf16.mxu0 %v2250
    %2391 = vmatpush1.bf16.msra.mxu0 %v2249
    %2392 = vmatprep.subr.bf16.mxu0 %v2254
    %2393 = vmatpush1.bf16.msra.mxu0 %v2253
    %2394 = vmatprep.subr.bf16.mxu0 %v2258
    %2395 = vmatpush1.bf16.msra.mxu0 %v2257
    %2396 = vmatprep.mubr.bf16.mxu0 %v1916
    %2397 = vmatmul.mubr.bf16.gmra.mrb[0].mxu0 %v1915
    %v2398 = vpop.f32.mrb[0].mxu0
    %v2399 = vadd.f32 %v1994, %v2398
    %v2400 = vpop.f32.mrb[0].mxu0
    %v2401 = vadd.f32 %v1998, %v2400
    %v2402 = vpop.f32.mrb[0].mxu0
    %v2403 = vpop.f32.mrb[0].mxu0
    %2404 = vdwg.mxu0
    %v2405 = vpack.c.bf16 %v2358, %v2358
    %v2406 = vpack.c.bf16 %v2360, %v2360
    %v2407 = vpack.c.bf16 %v2399, %v2399
    %v2408 = vpack.c.bf16 %v2401, %v2401
    %v2409 = vld [vmem:[#allocation22] sm:$0xff]
    %v2410 = vld [vmem:[#allocation22 + $0x8] sm:$0xff]
    %v2411 = vld [vmem:[#allocation22 + $0x10] sm:$0xff]
    %v2412 = vld [vmem:[#allocation22 + $0x18] sm:$0xff]
    %v2413 = vld [vmem:[#allocation22 + $0x20] sm:$0xff]
    %v2414 = vld [vmem:[#allocation22 + $0x28] sm:$0xff]
    %v2415 = vld [vmem:[#allocation22 + $0x30] sm:$0xff]
    %v2416 = vld [vmem:[#allocation22 + $0x38] sm:$0xff]
    %v2417 = vld [vmem:[#allocation22 + $0x40] sm:$0xff]
    %v2418 = vld [vmem:[#allocation22 + $0x48] sm:$0xff]
    %v2419 = vld [vmem:[#allocation22 + $0x50] sm:$0xff]
    %v2420 = vld [vmem:[#allocation22 + $0x58] sm:$0xff]
    %v2421 = vld [vmem:[#allocation22 + $0x60] sm:$0xff]
    %v2422 = vld [vmem:[#allocation22 + $0x68] sm:$0xff]
    %v2423 = vld [vmem:[#allocation22 + $0x70] sm:$0xff]
    %v2424 = vld [vmem:[#allocation22 + $0x78] sm:$0xff]
    %v2425 = vld [vmem:[#allocation22 + $0x80] sm:$0xff]
    %v2426 = vld [vmem:[#allocation22 + $0x88] sm:$0xff]
    %v2427 = vld [vmem:[#allocation22 + $0x90] sm:$0xff]
    %v2428 = vld [vmem:[#allocation22 + $0x98] sm:$0xff]
    %v2429 = vld [vmem:[#allocation22 + $0xa0] sm:$0xff]
    %v2430 = vld [vmem:[#allocation22 + $0xa8] sm:$0xff]
    %v2431 = vld [vmem:[#allocation22 + $0xb0] sm:$0xff]
    %v2432 = vld [vmem:[#allocation22 + $0xb8] sm:$0xff]
    %v2433 = vld [vmem:[#allocation22 + $0xc0] sm:$0xff]
    %v2434 = vld [vmem:[#allocation22 + $0xc8] sm:$0xff]
    %v2435 = vld [vmem:[#allocation22 + $0xd0] sm:$0xff]
    %v2436 = vld [vmem:[#allocation22 + $0xd8] sm:$0xff]
    %v2437 = vld [vmem:[#allocation22 + $0xe0] sm:$0xff]
    %v2438 = vld [vmem:[#allocation22 + $0xe8] sm:$0xff]
    %v2439 = vld [vmem:[#allocation22 + $0xf0] sm:$0xff]
    %v2440 = vld [vmem:[#allocation22 + $0xf8] sm:$0xff]
    %v2441 = vld [vmem:[#allocation22 + $0x100] sm:$0xff]
    %v2442 = vld [vmem:[#allocation22 + $0x108] sm:$0xff]
    %v2443 = vld [vmem:[#allocation22 + $0x110] sm:$0xff]
    %v2444 = vld [vmem:[#allocation22 + $0x118] sm:$0xff]
    %v2445 = vld [vmem:[#allocation22 + $0x120] sm:$0xff]
    %v2446 = vld [vmem:[#allocation22 + $0x128] sm:$0xff]
    %v2447 = vld [vmem:[#allocation22 + $0x130] sm:$0xff]
    %v2448 = vld [vmem:[#allocation22 + $0x138] sm:$0xff]
    %v2449 = vld [vmem:[#allocation22 + $0x140] sm:$0xff]
    %v2450 = vld [vmem:[#allocation22 + $0x148] sm:$0xff]
    %v2451 = vld [vmem:[#allocation22 + $0x150] sm:$0xff]
    %v2452 = vld [vmem:[#allocation22 + $0x158] sm:$0xff]
    %v2453 = vld [vmem:[#allocation22 + $0x160] sm:$0xff]
    %v2454 = vld [vmem:[#allocation22 + $0x168] sm:$0xff]
    %v2455 = vld [vmem:[#allocation22 + $0x170] sm:$0xff]
    %v2456 = vld [vmem:[#allocation22 + $0x178] sm:$0xff]
    %v2457 = vld [vmem:[#allocation22 + $0x180] sm:$0xff]
    %v2458 = vld [vmem:[#allocation22 + $0x188] sm:$0xff]
    %v2459 = vld [vmem:[#allocation22 + $0x190] sm:$0xff]
    %v2460 = vld [vmem:[#allocation22 + $0x198] sm:$0xff]
    %v2461 = vld [vmem:[#allocation22 + $0x1a0] sm:$0xff]
    %v2462 = vld [vmem:[#allocation22 + $0x1a8] sm:$0xff]
    %v2463 = vld [vmem:[#allocation22 + $0x1b0] sm:$0xff]
    %v2464 = vld [vmem:[#allocation22 + $0x1b8] sm:$0xff]
    %v2465 = vld [vmem:[#allocation22 + $0x1c0] sm:$0xff]
    %v2466 = vld [vmem:[#allocation22 + $0x1c8] sm:$0xff]
    %v2467 = vld [vmem:[#allocation22 + $0x1d0] sm:$0xff]
    %v2468 = vld [vmem:[#allocation22 + $0x1d8] sm:$0xff]
    %v2469 = vld [vmem:[#allocation22 + $0x1e0] sm:$0xff]
    %v2470 = vld [vmem:[#allocation22 + $0x1e8] sm:$0xff]
    %v2471 = vld [vmem:[#allocation22 + $0x1f0] sm:$0xff]
    %v2472 = vld [vmem:[#allocation22 + $0x1f8] sm:$0xff]
    %v2537 = vunpack.c.l.b16 %v2409
    %v2538 = vunpack.c.h.b16 %v2409
    %v2539 = vunpack.c.l.b16 %v2410
    %v2540 = vunpack.c.h.b16 %v2410
    %v2541 = vunpack.c.l.b16 %v2411
    %v2542 = vunpack.c.h.b16 %v2411
    %v2543 = vunpack.c.l.b16 %v2412
    %v2544 = vunpack.c.h.b16 %v2412
    %v2545 = vunpack.c.l.b16 %v2413
    %v2546 = vunpack.c.h.b16 %v2413
    %v2547 = vunpack.c.l.b16 %v2414
    %v2548 = vunpack.c.h.b16 %v2414
    %v2549 = vunpack.c.l.b16 %v2415
    %v2550 = vunpack.c.h.b16 %v2415
    %v2551 = vunpack.c.l.b16 %v2416
    %v2552 = vunpack.c.h.b16 %v2416
    %v2553 = vunpack.c.l.b16 %v2417
    %v2554 = vunpack.c.h.b16 %v2417
    %v2555 = vunpack.c.l.b16 %v2418
    %v2556 = vunpack.c.h.b16 %v2418
    %v2557 = vunpack.c.l.b16 %v2419
    %v2558 = vunpack.c.h.b16 %v2419
    %v2559 = vunpack.c.l.b16 %v2420
    %v2560 = vunpack.c.h.b16 %v2420
    %v2561 = vunpack.c.l.b16 %v2421
    %v2562 = vunpack.c.h.b16 %v2421
    %v2563 = vunpack.c.l.b16 %v2422
    %v2564 = vunpack.c.h.b16 %v2422
    %v2565 = vunpack.c.l.b16 %v2423
    %v2566 = vunpack.c.h.b16 %v2423
    %v2567 = vunpack.c.l.b16 %v2424
    %v2568 = vunpack.c.h.b16 %v2424
    %v2569 = vunpack.c.l.b16 %v2425
    %v2570 = vunpack.c.h.b16 %v2425
    %v2571 = vunpack.c.l.b16 %v2426
    %v2572 = vunpack.c.h.b16 %v2426
    %v2573 = vunpack.c.l.b16 %v2427
    %v2574 = vunpack.c.h.b16 %v2427
    %v2575 = vunpack.c.l.b16 %v2428
    %v2576 = vunpack.c.h.b16 %v2428
    %v2577 = vunpack.c.l.b16 %v2429
    %v2578 = vunpack.c.h.b16 %v2429
    %v2579 = vunpack.c.l.b16 %v2430
    %v2580 = vunpack.c.h.b16 %v2430
    %v2581 = vunpack.c.l.b16 %v2431
    %v2582 = vunpack.c.h.b16 %v2431
    %v2583 = vunpack.c.l.b16 %v2432
    %v2584 = vunpack.c.h.b16 %v2432
    %v2585 = vunpack.c.l.b16 %v2433
    %v2586 = vunpack.c.h.b16 %v2433
    %v2587 = vunpack.c.l.b16 %v2434
    %v2588 = vunpack.c.h.b16 %v2434
    %v2589 = vunpack.c.l.b16 %v2435
    %v2590 = vunpack.c.h.b16 %v2435
    %v2591 = vunpack.c.l.b16 %v2436
    %v2592 = vunpack.c.h.b16 %v2436
    %v2593 = vunpack.c.l.b16 %v2437
    %v2594 = vunpack.c.h.b16 %v2437
    %v2595 = vunpack.c.l.b16 %v2438
    %v2596 = vunpack.c.h.b16 %v2438
    %v2597 = vunpack.c.l.b16 %v2439
    %v2598 = vunpack.c.h.b16 %v2439
    %v2599 = vunpack.c.l.b16 %v2440
    %v2600 = vunpack.c.h.b16 %v2440
    %v2601 = vunpack.c.l.b16 %v2441
    %v2602 = vunpack.c.h.b16 %v2441
    %v2603 = vunpack.c.l.b16 %v2442
    %v2604 = vunpack.c.h.b16 %v2442
    %v2605 = vunpack.c.l.b16 %v2443
    %v2606 = vunpack.c.h.b16 %v2443
    %v2607 = vunpack.c.l.b16 %v2444
    %v2608 = vunpack.c.h.b16 %v2444
    %v2609 = vunpack.c.l.b16 %v2445
    %v2610 = vunpack.c.h.b16 %v2445
    %v2611 = vunpack.c.l.b16 %v2446
    %v2612 = vunpack.c.h.b16 %v2446
    %v2613 = vunpack.c.l.b16 %v2447
    %v2614 = vunpack.c.h.b16 %v2447
    %v2615 = vunpack.c.l.b16 %v2448
    %v2616 = vunpack.c.h.b16 %v2448
    %v2617 = vunpack.c.l.b16 %v2449
    %v2618 = vunpack.c.h.b16 %v2449
    %v2619 = vunpack.c.l.b16 %v2450
    %v2620 = vunpack.c.h.b16 %v2450
    %v2621 = vunpack.c.l.b16 %v2451
    %v2622 = vunpack.c.h.b16 %v2451
    %v2623 = vunpack.c.l.b16 %v2452
    %v2624 = vunpack.c.h.b16 %v2452
    %v2625 = vunpack.c.l.b16 %v2453
    %v2626 = vunpack.c.h.b16 %v2453
    %v2627 = vunpack.c.l.b16 %v2454
    %v2628 = vunpack.c.h.b16 %v2454
    %v2629 = vunpack.c.l.b16 %v2455
    %v2630 = vunpack.c.h.b16 %v2455
    %v2631 = vunpack.c.l.b16 %v2456
    %v2632 = vunpack.c.h.b16 %v2456
    %v2633 = vunpack.c.l.b16 %v2457
    %v2634 = vunpack.c.h.b16 %v2457
    %v2635 = vunpack.c.l.b16 %v2458
    %v2636 = vunpack.c.h.b16 %v2458
    %v2637 = vunpack.c.l.b16 %v2459
    %v2638 = vunpack.c.h.b16 %v2459
    %v2639 = vunpack.c.l.b16 %v2460
    %v2640 = vunpack.c.h.b16 %v2460
    %v2641 = vunpack.c.l.b16 %v2461
    %v2642 = vunpack.c.h.b16 %v2461
    %v2643 = vunpack.c.l.b16 %v2462
    %v2644 = vunpack.c.h.b16 %v2462
    %v2645 = vunpack.c.l.b16 %v2463
    %v2646 = vunpack.c.h.b16 %v2463
    %v2647 = vunpack.c.l.b16 %v2464
    %v2648 = vunpack.c.h.b16 %v2464
    %v2649 = vunpack.c.l.b16 %v2465
    %v2650 = vunpack.c.h.b16 %v2465
    %v2651 = vunpack.c.l.b16 %v2466
    %v2652 = vunpack.c.h.b16 %v2466
    %v2653 = vunpack.c.l.b16 %v2467
    %v2654 = vunpack.c.h.b16 %v2467
    %v2655 = vunpack.c.l.b16 %v2468
    %v2656 = vunpack.c.h.b16 %v2468
    %v2657 = vunpack.c.l.b16 %v2469
    %v2658 = vunpack.c.h.b16 %v2469
    %v2659 = vunpack.c.l.b16 %v2470
    %v2660 = vunpack.c.h.b16 %v2470
    %v2661 = vunpack.c.l.b16 %v2471
    %v2662 = vunpack.c.h.b16 %v2471
    %v2663 = vunpack.c.l.b16 %v2472
    %v2664 = vunpack.c.h.b16 %v2472
    %v2665 = vpack.c.b16 %v2539, %v2537
    %v2666 = vpack.c.b16 %v2540, %v2538
    %v2667 = vpack.c.b16 %v2543, %v2541
    %v2668 = vpack.c.b16 %v2544, %v2542
    %v2669 = vpack.c.b16 %v2547, %v2545
    %v2670 = vpack.c.b16 %v2548, %v2546
    %v2671 = vpack.c.b16 %v2551, %v2549
    %v2672 = vpack.c.b16 %v2552, %v2550
    %v2673 = vpack.c.b16 %v2555, %v2553
    %v2674 = vpack.c.b16 %v2556, %v2554
    %v2675 = vpack.c.b16 %v2559, %v2557
    %v2676 = vpack.c.b16 %v2560, %v2558
    %v2677 = vpack.c.b16 %v2563, %v2561
    %v2678 = vpack.c.b16 %v2564, %v2562
    %v2679 = vpack.c.b16 %v2567, %v2565
    %v2680 = vpack.c.b16 %v2568, %v2566
    %v2681 = vpack.c.b16 %v2571, %v2569
    %v2682 = vpack.c.b16 %v2572, %v2570
    %v2683 = vpack.c.b16 %v2575, %v2573
    %v2684 = vpack.c.b16 %v2576, %v2574
    %v2685 = vpack.c.b16 %v2579, %v2577
    %v2686 = vpack.c.b16 %v2580, %v2578
    %v2687 = vpack.c.b16 %v2583, %v2581
    %v2688 = vpack.c.b16 %v2584, %v2582
    %v2689 = vpack.c.b16 %v2587, %v2585
    %v2690 = vpack.c.b16 %v2588, %v2586
    %v2691 = vpack.c.b16 %v2591, %v2589
    %v2692 = vpack.c.b16 %v2592, %v2590
    %v2693 = vpack.c.b16 %v2595, %v2593
    %v2694 = vpack.c.b16 %v2596, %v2594
    %v2695 = vpack.c.b16 %v2599, %v2597
    %v2696 = vpack.c.b16 %v2600, %v2598
    %v2697 = vpack.c.b16 %v2603, %v2601
    %v2698 = vpack.c.b16 %v2604, %v2602
    %v2699 = vpack.c.b16 %v2607, %v2605
    %v2700 = vpack.c.b16 %v2608, %v2606
    %v2701 = vpack.c.b16 %v2611, %v2609
    %v2702 = vpack.c.b16 %v2612, %v2610
    %v2703 = vpack.c.b16 %v2615, %v2613
    %v2704 = vpack.c.b16 %v2616, %v2614
    %v2705 = vpack.c.b16 %v2619, %v2617
    %v2706 = vpack.c.b16 %v2620, %v2618
    %v2707 = vpack.c.b16 %v2623, %v2621
    %v2708 = vpack.c.b16 %v2624, %v2622
    %v2709 = vpack.c.b16 %v2627, %v2625
    %v2710 = vpack.c.b16 %v2628, %v2626
    %v2711 = vpack.c.b16 %v2631, %v2629
    %v2712 = vpack.c.b16 %v2632, %v2630
    %v2713 = vpack.c.b16 %v2635, %v2633
    %v2714 = vpack.c.b16 %v2636, %v2634
    %v2715 = vpack.c.b16 %v2639, %v2637
    %v2716 = vpack.c.b16 %v2640, %v2638
    %v2717 = vpack.c.b16 %v2643, %v2641
    %v2718 = vpack.c.b16 %v2644, %v2642
    %v2719 = vpack.c.b16 %v2647, %v2645
    %v2720 = vpack.c.b16 %v2648, %v2646
    %v2721 = vpack.c.b16 %v2651, %v2649
    %v2722 = vpack.c.b16 %v2652, %v2650
    %v2723 = vpack.c.b16 %v2655, %v2653
    %v2724 = vpack.c.b16 %v2656, %v2654
    %v2725 = vpack.c.b16 %v2659, %v2657
    %v2726 = vpack.c.b16 %v2660, %v2658
    %v2727 = vpack.c.b16 %v2663, %v2661
    %v2728 = vpack.c.b16 %v2664, %v2662
    %2793 = vmatprep.subr.bf16.mxu0 %v2666
    %2794 = vmatpush1.bf16.msra.mxu0 %v2665
    %2795 = vmatprep.subr.bf16.mxu0 %v2668
    %2796 = vmatpush1.bf16.msra.mxu0 %v2667
    %2797 = vmatprep.subr.bf16.mxu0 %v2670
    %2798 = vmatpush1.bf16.msra.mxu0 %v2669
    %2799 = vmatprep.subr.bf16.mxu0 %v2672
    %2800 = vmatpush1.bf16.msra.mxu0 %v2671
    %2801 = vmatprep.subr.bf16.mxu0 %v2674
    %2802 = vmatpush1.bf16.msra.mxu0 %v2673
    %2803 = vmatprep.subr.bf16.mxu0 %v2676
    %2804 = vmatpush1.bf16.msra.mxu0 %v2675
    %2805 = vmatprep.subr.bf16.mxu0 %v2678
    %2806 = vmatpush1.bf16.msra.mxu0 %v2677
    %2807 = vmatprep.subr.bf16.mxu0 %v2680
    %2808 = vmatpush1.bf16.msra.mxu0 %v2679
    %2809 = vmatprep.subr.bf16.mxu0 %v2682
    %2810 = vmatpush1.bf16.msra.mxu0 %v2681
    %2811 = vmatprep.subr.bf16.mxu0 %v2684
    %2812 = vmatpush1.bf16.msra.mxu0 %v2683
    %2813 = vmatprep.subr.bf16.mxu0 %v2686
    %2814 = vmatpush1.bf16.msra.mxu0 %v2685
    %2815 = vmatprep.subr.bf16.mxu0 %v2688
    %2816 = vmatpush1.bf16.msra.mxu0 %v2687
    %2817 = vmatprep.subr.bf16.mxu0 %v2690
    %2818 = vmatpush1.bf16.msra.mxu0 %v2689
    %2819 = vmatprep.subr.bf16.mxu0 %v2692
    %2820 = vmatpush1.bf16.msra.mxu0 %v2691
    %2821 = vmatprep.subr.bf16.mxu0 %v2694
    %2822 = vmatpush1.bf16.msra.mxu0 %v2693
    %2823 = vmatprep.subr.bf16.mxu0 %v2696
    %2824 = vmatpush1.bf16.msra.mxu0 %v2695
    %2825 = vmatprep.mubr.bf16.mxu0 %v2406
    %2826 = vmatmul.mubr.bf16.gmra.mrb[0].mxu0 %v2405
    %v2827 = vpop.f32.mrb[0].mxu0
    %v2828 = vadd.f32 0.0, %v2827
    %v2829 = vpop.f32.mrb[0].mxu0
    %v2830 = vadd.f32 0.0, %v2829
    %v2831 = vpop.f32.mrb[0].mxu0
    %v2832 = vpop.f32.mrb[0].mxu0
    %2833 = vdwg.mxu0
    %2834 = vmatprep.subr.bf16.mxu0 %v2698
    %2835 = vmatpush1.bf16.msra.mxu0 %v2697
    %2836 = vmatprep.subr.bf16.mxu0 %v2700
    %2837 = vmatpush1.bf16.msra.mxu0 %v2699
    %2838 = vmatprep.subr.bf16.mxu0 %v2702
    %2839 = vmatpush1.bf16.msra.mxu0 %v2701
    %2840 = vmatprep.subr.bf16.mxu0 %v2704
    %2841 = vmatpush1.bf16.msra.mxu0 %v2703
    %2842 = vmatprep.subr.bf16.mxu0 %v2706
    %2843 = vmatpush1.bf16.msra.mxu0 %v2705
    %2844 = vmatprep.subr.bf16.mxu0 %v2708
    %2845 = vmatpush1.bf16.msra.mxu0 %v2707
    %2846 = vmatprep.subr.bf16.mxu0 %v2710
    %2847 = vmatpush1.bf16.msra.mxu0 %v2709
    %2848 = vmatprep.subr.bf16.mxu0 %v2712
    %2849 = vmatpush1.bf16.msra.mxu0 %v2711
    %2850 = vmatprep.subr.bf16.mxu0 %v2714
    %2851 = vmatpush1.bf16.msra.mxu0 %v2713
    %2852 = vmatprep.subr.bf16.mxu0 %v2716
    %2853 = vmatpush1.bf16.msra.mxu0 %v2715
    %2854 = vmatprep.subr.bf16.mxu0 %v2718
    %2855 = vmatpush1.bf16.msra.mxu0 %v2717
    %2856 = vmatprep.subr.bf16.mxu0 %v2720
    %2857 = vmatpush1.bf16.msra.mxu0 %v2719
    %2858 = vmatprep.subr.bf16.mxu0 %v2722
    %2859 = vmatpush1.bf16.msra.mxu0 %v2721
    %2860 = vmatprep.subr.bf16.mxu0 %v2724
    %2861 = vmatpush1.bf16.msra.mxu0 %v2723
    %2862 = vmatprep.subr.bf16.mxu0 %v2726
    %2863 = vmatpush1.bf16.msra.mxu0 %v2725
    %2864 = vmatprep.subr.bf16.mxu0 %v2728
    %2865 = vmatpush1.bf16.msra.mxu0 %v2727
    %2866 = vmatprep.mubr.bf16.mxu0 %v2408
    %2867 = vmatmul.mubr.bf16.gmra.mrb[0].mxu0 %v2407
    %v2868 = vpop.f32.mrb[0].mxu0
    %v2869 = vadd.f32 %v2828, %v2868
    %v2870 = vpop.f32.mrb[0].mxu0
    %v2871 = vadd.f32 %v2830, %v2870
    %v2872 = vpop.f32.mrb[0].mxu0
    %v2873 = vpop.f32.mrb[0].mxu0
    %2874 = vdwg.mxu0
    %v2877 = vcombine.low %v2869, %v2871
    %v2879 = vunpack.c.l.s4 1983009808
    %v2880 = vunpack.c.0.s8 %v2879
    %v2881 = vlaneseq
    %v2882 = vshrl.u32 %v2881, 7
    %v2883 = vsub.s32 %v2880, %v2882
    %v2884 = vrot.slane %v2877, %v2883
    %2886 = vst [vmem:[%s23] sm:$0xf] %v2884
    // Predicated region
    $region138: #{vae_forward.1} parent=1 // pred_check
      _
    $region139: #{vae_forward.1} parent=1 // pred_check_branch
      %2888 = sbr.rel (0) target = $region141
    $region140: #{vae_forward.1} parent=1 // pred_region
      %s2890 = ssub.s32 32, 32
      %2891 = vsyncadd [#allocation4], %s2890
      %s2893 = sshll.u32 [#allocation23], 4
      %s2894 = int_to_ptr.vmem [resolvable:$true] %s2893
      %2896 = dma.vmem_to_hbm [thread:$0]  %s2894, 32, %s21, [#allocation4]
    $region141: #{vae_forward.1} parent=1 // pred_fallthru
      _
    // Predicated region
    $region142: #{vae_forward.1} parent=1 // pred_check
      _
    $region143: #{vae_forward.1} parent=1 // pred_check_branch
      %2898 = sbr.rel (0) target = $region145
    $region144: #{vae_forward.1} parent=1 // pred_region
      %s2900 = ssub.s32 32, 32
      %2901 = vsyncadd [#allocation25], %s2900
      %s2903 = sshll.u32 [#allocation24], 4
      %s2904 = int_to_ptr.vmem [resolvable:$true] %s2903
      %2906 = dma.vmem_to_hbm [thread:$0]  %s2904, 32, %s22, [#allocation25]
    $region145: #{vae_forward.1} parent=1 // pred_fallthru
      _
    // Predicated region
    $region146: #{vae_forward.1} parent=1 // pred_check
      _
    $region147: #{vae_forward.1} parent=1 // pred_check_branch
      %2908 = sbr.rel (0) target = $region149
    $region148: #{vae_forward.1} parent=1 // pred_region
      _
    $region149: #{vae_forward.1} parent=1 // pred_fallthru
      _
    // Predicated region
    $region150: #{vae_forward.1} parent=1 // pred_check
      _
    $region151: #{vae_forward.1} parent=1 // pred_check_branch
      %2910 = sbr.rel (0) target = $region153
    $region152: #{vae_forward.1} parent=1 // pred_region
      %2911 = dma.done [#allocation4], 32
    $region153: #{vae_forward.1} parent=1 // pred_fallthru
      _
    // Predicated region
    $region154: #{vae_forward.1} parent=1 // pred_check
      _
    $region155: #{vae_forward.1} parent=1 // pred_check_branch
      %2913 = sbr.rel (0) target = $region157
    $region156: #{vae_forward.1} parent=1 // pred_region
      %2914 = dma.done [#allocation25], 32
    $region157: #{vae_forward.1} parent=1 // pred_fallthru
      _
    // Predicated region
    $region158: #{vae_forward.1} parent=1 // pred_check
      _
    $region159: #{vae_forward.1} parent=1 // pred_check_branch
      %2916 = sbr.rel (0) target = $region161
    $region160: #{vae_forward.1} parent=1 // pred_region
      _
    $region161: #{vae_forward.1} parent=1 // pred_fallthru
      _
    %2917 = vsyncpa [#allocation3], 1
    %2918 = vsyncpa [#allocation6], 1
    %2919 = vsyncpa [#allocation9], 1
    %2920 = vsyncpa [#allocation12], 1
    %2921 = vsyncpa [#allocation15], 1
    %2922 = vsyncpa [#allocation18], 1
    %2923 = vsyncpa [#allocation21], 1
    %2924 = vsyncpa [#allocation4], 1
    %2925 = vsyncpa [#allocation25], 1

</llo_original>
